<compile_context>
chip_gen: v7x
topology: tpu7x:2x2x1
jax: 0.10.0
libtpu: 0.0.40
codegen_flags: <defaults>
</compile_context>

<pallas_src>
import numpy as np
import jax
import jax.numpy as jnp
from jax.experimental import pallas as pl
from jax.experimental.pallas import tpu as pltpu

# ----------------------------- model sizes (small) --------------------------
B          = 2          # batch (posts)
N_SENT     = 8          # sentences per post
N_WORDS    = 6          # words per sentence
VOCAB      = 50
EW         = 48         # word embedding dim
EG         = 32         # graph_glove_dim (comment node feature dim)
SENT_H     = 16         # sent_hidden_size -> content embedding dim = 2*SENT_H
GRAPH_H    = 16         # graph_hidden     -> comment embedding dim = 2*GRAPH_H
D          = 2 * SENT_H # = embedding_dim = latent_dim = 32
K_ATT      = 32         # co-attention hidden size
M_NODES    = 10         # max_comment_count
NUM_CLASS  = 2

BN      = B * N_SENT    # 16
BM      = B * M_NODES   # 20
IN_TOT  = EW + EG       # 80  fused encoder input width
X_ROWS  = BN + BM       # 36  fused encoder input rows

# -------------------- dense packed weight slab: (80, 128) f32 ----------------
LANES     = 128
PACK_ROWS = 80          # 40 KiB total

# column-band layout (all kernel slices are static):
C_ENC   = 0     # rows 0:80  cols  0:32   [w_cont; w_com] fused encoder weight
C_WL    = 32    # rows 0:32  cols 32:64   Wl
C_WS    = 64    # rows 0:32  cols 64:96   Ws
C_WC    = 96    # rows 0:32  cols 96:128  Wc
R_MISC  = 32    # misc band rows 32:64
C_WHS   = 32    #   cols 32:48   whs^T replicated over B*N lanes    (K, BN)
C_WHC   = 48    #   cols 48:68   whc^T replicated over B*M lanes    (K, BM)
C_WFS   = 68    #   cols 68:70   fc weight, co_s half               (D, 2)
C_WFCC  = 70    #   cols 70:72   fc weight, co_c half               (D, 2)
C_MSKL  = 72    #   rows 32:52 cols 72:88  block-diag mask for L    (BM, BN)
R_BFC   = 52    #   row  52    cols 88:90  fc bias                  (1, 2)
C_BFC   = 88
R_MSKA  = 64    # rows 64:66
C_MSKAS = 32    #   cols 32:48  block-diag row mask for A_s         (B, BN)
C_MSKAC = 48    #   cols 48:68  block-diag row mask for A_c         (B, BM)

# --------------- merged lane-dense output slab: (B, 128) f32 ----------------
OUT_W    = LANES
COL_PRED = 0
COL_AS   = NUM_CLASS
COL_AC   = NUM_CLASS + N_SENT
PAD_W    = OUT_W - (NUM_CLASS + N_SENT + M_NODES)


# ------------------------------- Pallas kernel ------------------------------
def hyphen_kernel(x_ref, wp_ref, out_ref):
    f32 = jnp.float32
    dn_rr = (((1,), (1,)), ((), ()))   # contract last dim of both operands

    # Static slices of the single dense weight/mask slab (one DMA).
    w_enc   = wp_ref[0:IN_TOT, C_ENC:C_ENC + D]                        # (80, 32)
    wl      = wp_ref[0:D,      C_WL:C_WL + D]                          # (32, 32)
    ws      = wp_ref[0:K_ATT,  C_WS:C_WS + D]                          # (32, 32)
    wc      = wp_ref[0:K_ATT,  C_WC:C_WC + D]                          # (32, 32)
    whs_rep = wp_ref[R_MISC:R_MISC + K_ATT, C_WHS:C_WHS + BN]          # (32, 16)
    whc_rep = wp_ref[R_MISC:R_MISC + K_ATT, C_WHC:C_WHC + BM]          # (32, 20)
    wfc_s   = wp_ref[R_MISC:R_MISC + D, C_WFS:C_WFS + NUM_CLASS]       # (32, 2)
    wfc_c   = wp_ref[R_MISC:R_MISC + D, C_WFCC:C_WFCC + NUM_CLASS]     # (32, 2)
    mask_L  = wp_ref[R_MISC:R_MISC + BM, C_MSKL:C_MSKL + BN]           # (20, 16)
    b_fc    = wp_ref[R_BFC:R_BFC + 1,   C_BFC:C_BFC + NUM_CLASS]       # (1, 2)
    msk_as  = wp_ref[R_MSKA:R_MSKA + B, C_MSKAS:C_MSKAS + BN]          # (2, 16)
    msk_ac  = wp_ref[R_MSKA:R_MSKA + B, C_MSKAC:C_MSKAC + BM]          # (2, 20)

    # --- fused encoder stand-ins (content rows | comment rows), one matmul --
    # tanh(linear); the PoincareBall (c=1) expmap0 -> logmap0 round trip of
    # the original model is the identity here, so it is elided (kernel + ref).
    enc = jnp.tanh(jnp.dot(x_ref[...], w_enc, preferred_element_type=f32))  # (36, 32)
    s_all = enc[0:BN, :]             # (16, 32) tangent sentence reps
    c_all = enc[BN:BN + BM, :]       # (20, 32) tangent comment reps
    enc_T = enc.T                    # (32, 36) single explicit XLU transpose
    s_T = enc_T[:, 0:BN]             # (32, 16)
    c_T = enc_T[:, BN:BN + BM]       # (32, 20)

    # --- co-attention, batched over B via block-diagonal masking ------------
    cW   = jnp.dot(c_all, wl, preferred_element_type=f32)                    # (20, 32)
    L    = jnp.tanh(jnp.dot(cW, s_T, preferred_element_type=f32)) * mask_L   # (20, 16)
    Ws_s = jnp.dot(ws, s_T, preferred_element_type=f32)                      # (32, 16)
    Wc_c = jnp.dot(wc, c_T, preferred_element_type=f32)                      # (32, 20)
    Hs = jnp.tanh(Ws_s + jnp.dot(Wc_c, L, preferred_element_type=f32))       # (32, 16)
    Hc = jnp.tanh(Wc_c + jax.lax.dot_general(Ws_s, L, dn_rr,
                                             preferred_element_type=f32))    # (32, 20)

    # attention scores: whs/whc pre-replicated -> pure VPU mul + sublane reduce
    sc_s = jnp.sum(whs_rep * Hs, axis=0, keepdims=True)    # (1, 16)
    sc_c = jnp.sum(whc_rep * Hc, axis=0, keepdims=True)    # (1, 20)

    # Per-post softmax without reshapes or per-post loops: softmax is
    # shift-invariant per row, so one global max is valid; block-diag row
    # masks give per-post denominators AND directly yield the block-diagonal
    # attention matrices used for co_s / co_c.
    def blk_softmax(scores, msk):
        e = jnp.exp(scores - jnp.max(scores, axis=1, keepdims=True))   # (1, L)
        e_bd = msk * e                                                  # (B, L)
        den = jnp.sum(e_bd, axis=1, keepdims=True)                      # (B, 1)
        return e_bd * pl.reciprocal(den, approx=True)                   # (B, L)

    A_s = blk_softmax(sc_s, msk_as)   # (2, 16) block-diagonal, rows sum to 1
    A_c = blk_softmax(sc_c, msk_ac)   # (2, 20)

    co_s = jnp.dot(A_s, s_all, preferred_element_type=f32)   # (2, 32)
    co_c = jnp.dot(A_c, c_all, preferred_element_type=f32)   # (2, 32)

    # fc(concat([co_s, co_c])) == co_s @ W_top + co_c @ W_bot + b
    preds = (jnp.dot(co_s, wfc_s, preferred_element_type=f32)
             + jnp.dot(co_c, wfc_c, preferred_element_type=f32)
             + b_fc)                                          # (2, 2)

    # collapse the block-diagonal rows to per-post attention rows
    As_out = A_s[:, 0:N_SENT] + A_s[:, N_SENT:2 * N_SENT]      # (2, 8)
    Ac_out = A_c[:, 0:M_NODES] + A_c[:, M_NODES:2 * M_NODES]   # (2, 10)

    # single lane-dense writeback: one full-row store
    out_ref[...] = jnp.concatenate(
        [preds, As_out, Ac_out, jnp.zeros((B, PAD_W), f32)], axis=1)


# ----------------------- host-side weight packing (hoisted) ------------------
def pack_weights(params):
    """Build the dense (80, 128) weight/mask slab ONCE (outside the per-call
    jitted path; params are static for inference)."""
    (w_cont, w_com, wl, ws, wc, whs, whc, w_fc, b_fc) = [
        np.asarray(p, np.float32) for p in params]

    wp = np.zeros((PACK_ROWS, LANES), np.float32)
    wp[0:EW, C_ENC:C_ENC + D] = w_cont                    # fused encoder weight
    wp[EW:EW + EG, C_ENC:C_ENC + D] = w_com
    wp[0:D, C_WL:C_WL + D] = wl
    wp[0:K_ATT, C_WS:C_WS + D] = ws
    wp[0:K_ATT, C_WC:C_WC + D] = wc
    wp[R_MISC:R_MISC + K_ATT, C_WHS:C_WHS + BN] = np.broadcast_to(whs.T, (K_ATT, BN))
    wp[R_MISC:R_MISC + K_ATT, C_WHC:C_WHC + BM] = np.broadcast_to(whc.T, (K_ATT, BM))
    wp[R_MISC:R_MISC + D, C_WFS:C_WFS + NUM_CLASS] = w_fc[0:D, :]
    wp[R_MISC:R_MISC + D, C_WFCC:C_WFCC + NUM_CLASS] = w_fc[D:2 * D, :]
    wp[R_BFC:R_BFC + 1, C_BFC:C_BFC + NUM_CLASS] = b_fc

    # static block-diagonal masks (free at pack time)
    post_of_sent = np.arange(BN) // N_SENT
    post_of_com = np.arange(BM) // M_NODES
    wp[R_MISC:R_MISC + BM, C_MSKL:C_MSKL + BN] = (
        post_of_com[:, None] == post_of_sent[None, :]).astype(np.float32)
    wp[R_MSKA:R_MSKA + B, C_MSKAS:C_MSKAS + BN] = (
        np.arange(B)[:, None] == post_of_sent[None, :]).astype(np.float32)
    wp[R_MSKA:R_MSKA + B, C_MSKAC:C_MSKAC + BM] = (
        np.arange(B)[:, None] == post_of_com[None, :]).astype(np.float32)
    return jnp.asarray(wp)


# --------------------------------- wrapper -----------------------------------
@jax.jit
def hyphen_forward(content_ids, embedding_matrix, comment_feats, wpack):
    # glue (XLA side): word embedding lookup + mean pool over words
    cont_feat = jnp.take(embedding_matrix, content_ids, axis=0)    # (B, N, W, EW)
    cont_feat = jnp.mean(cont_feat, axis=2).astype(jnp.float32)    # (B, N, EW)

    # Fuse content + comment features into ONE input slab (36, 80): content
    # rows carry features in cols 0:EW, comment rows in cols EW:EW+EG, so a
    # single (36,80)@(80,32) matmul in the kernel yields [s_all; c_all].
    x_slab = jnp.concatenate([
        jnp.pad(cont_feat.reshape(BN, EW), ((0, 0), (0, EG))),
        jnp.pad(comment_feats.astype(jnp.float32).reshape(BM, EG), ((0, 0), (EW, 0))),
    ], axis=0)                                                     # (36, 80)

    full = lambda shape: pl.BlockSpec(shape, lambda i: (0, 0))

    out = pl.pallas_call(
        hyphen_kernel,
        out_shape=jax.ShapeDtypeStruct((B, OUT_W), jnp.float32),
        grid_spec=pltpu.PrefetchScalarGridSpec(
            num_scalar_prefetch=0,
            grid=(1,),                       # single step; batch handled inside
            in_specs=[
                full((X_ROWS, IN_TOT)),      # fused feature slab
                full((PACK_ROWS, LANES)),    # dense weight/mask slab
            ],
            out_specs=full((B, OUT_W)),
        ),
        compiler_params=pltpu.CompilerParams(dimension_semantics=("arbitrary",)),
    )(x_slab, wpack)

    preds = out[:, COL_PRED:COL_PRED + NUM_CLASS]
    As = out[:, COL_AS:COL_AS + N_SENT].reshape(B, 1, N_SENT)
    Ac = out[:, COL_AC:COL_AC + M_NODES].reshape(B, 1, M_NODES)
    return preds, As, Ac


# ------------------------- pure-JAX reference (check) -------------------------
def hyphen_ref(content_ids, embedding_matrix, comment_feats, params):
    (w_cont, w_com, wl, ws, wc, whs, whc, w_fc, b_fc) = params
    cont_feat = jnp.mean(jnp.take(embedding_matrix, content_ids, axis=0), axis=2)
    comm_feat = comment_feats

    # logmap0(expmap0(v)) == v on the Poincare ball (c=1): round trip elided
    # here and in the kernel (tangent-space co-attention).
    s_tan = jnp.tanh(cont_feat @ w_cont)   # (B, N, D)
    c_tan = jnp.tanh(comm_feat @ w_com)    # (B, M, D)

    L = jnp.tanh(jnp.einsum("bmd,de,bne->bmn", c_tan, wl, s_tan))
    Ws_s = jnp.einsum("kd,bnd->bkn", ws, s_tan)
    Wc_c = jnp.einsum("kd,bmd->bkm", wc, c_tan)
    Hs = jnp.tanh(Ws_s + jnp.einsum("bkm,bmn->bkn", Wc_c, L))
    Hc = jnp.tanh(Wc_c + jnp.einsum("bkn,bmn->bkm", Ws_s, L))
    As = jax.nn.softmax(jnp.einsum("ok,bkn->bon", whs, Hs), axis=-1)
    Ac = jax.nn.softmax(jnp.einsum("ok,bkm->bom", whc, Hc), axis=-1)
    co_s = jnp.einsum("bon,bnd->bod", As, s_tan)
    co_c = jnp.einsum("bom,bmd->bod", Ac, c_tan)
    coatten = jnp.concatenate([co_s, co_c], -1)[:, 0, :]     # (B, 2D)
    preds = coatten @ w_fc + b_fc
    return preds, As, Ac


# ----------------------------------- main ------------------------------------
if __name__ == "__main__":
    key = jax.random.PRNGKey(0)
    ks = jax.random.split(key, 12)

    content_ids = jax.random.randint(ks[0], (B, N_SENT, N_WORDS), 0, VOCAB)
    embedding_matrix = jax.random.normal(ks[1], (VOCAB, EW), jnp.float32) * 0.5
    comment_feats = jax.random.normal(ks[2], (B, M_NODES, EG), jnp.float32) * 0.5

    scale = 0.1
    params = (
        jax.random.normal(ks[3],  (EW, D),            jnp.float32) * scale,  # content enc proj
        jax.random.normal(ks[4],  (EG, D),            jnp.float32) * scale,  # comment enc proj
        jax.random.normal(ks[5],  (D, D),             jnp.float32) * scale,  # Wl
        jax.random.normal(ks[6],  (K_ATT, D),         jnp.float32) * scale,  # Ws
        jax.random.normal(ks[7],  (K_ATT, D),         jnp.float32) * scale,  # Wc
        jax.random.normal(ks[8],  (1, K_ATT),         jnp.float32) * scale,  # whs
        jax.random.normal(ks[9],  (1, K_ATT),         jnp.float32) * scale,  # whc
        jax.random.normal(ks[10], (2 * D, NUM_CLASS), jnp.float32) * scale,  # fc weight
        jax.random.normal(ks[11], (1, NUM_CLASS),     jnp.float32) * scale,  # fc bias
    )

    # packed once, outside the per-call path
    wpack = jax.block_until_ready(pack_weights(params))

    preds, As, Ac = jax.block_until_ready(
        hyphen_forward(content_ids, embedding_matrix, comment_feats, wpack))

    preds_r, As_r, Ac_r = hyphen_ref(content_ids, embedding_matrix, comment_feats, params)

    assert preds.shape == (B, NUM_CLASS) and As.shape == (B, 1, N_SENT) and Ac.shape == (B, 1, M_NODES)
    assert not bool(jnp.isnan(preds).any()), "preds is nan"
    # tolerances account for pl.reciprocal(approx=True) in the softmax denom
    assert jnp.allclose(preds, preds_r, atol=2e-3, rtol=2e-3)
    assert jnp.allclose(As, As_r, atol=2e-3, rtol=2e-3)
    assert jnp.allclose(Ac, Ac_r, atol=2e-3, rtol=2e-3)

    print("KERNEL_OK")
</pallas_src>

<mosaic_0001>
module attributes {stable_mosaic.version = 11 : i64} {
  func.func @hyphen_kernel(%arg0: i32, %arg1: memref<36x80xf32, #tpu.memory_space<vmem>>, %arg2: memref<80x128xf32, #tpu.memory_space<vmem>>, %arg3: memref<2x128xf32, #tpu.memory_space<vmem>>) attributes {dimension_semantics = [#tpu.dimension_semantics<arbitrary>], iteration_bounds = array<i64: 1>, scalar_prefetch = 0 : i64, scratch_operands = 0 : i64, tpu.core_type = #tpu.core_type<tc>, window_params = [{pipeline_mode = #tpu.pipeline_mode<synchronous>, transform_indices = @transform_0, window_bounds = array<i64: 36, 80>}, {pipeline_mode = #tpu.pipeline_mode<synchronous>, transform_indices = @transform_1, window_bounds = array<i64: 80, 128>}, {pipeline_mode = #tpu.pipeline_mode<synchronous>, transform_indices = @transform_2, window_bounds = array<i64: 2, 128>}]} {
    %c0 = arith.constant 0 : index
    %c0_0 = arith.constant 0 : index
    %0 = vector.load %arg2[%c0, %c0_0] : memref<80x128xf32, #tpu.memory_space<vmem>>, vector<80x32xf32>
    %c0_1 = arith.constant 0 : index
    %c32 = arith.constant 32 : index
    %1 = vector.load %arg2[%c0_1, %c32] : memref<80x128xf32, #tpu.memory_space<vmem>>, vector<32x32xf32>
    %c0_2 = arith.constant 0 : index
    %c64 = arith.constant 64 : index
    %2 = vector.load %arg2[%c0_2, %c64] : memref<80x128xf32, #tpu.memory_space<vmem>>, vector<32x32xf32>
    %c0_3 = arith.constant 0 : index
    %c96 = arith.constant 96 : index
    %3 = vector.load %arg2[%c0_3, %c96] : memref<80x128xf32, #tpu.memory_space<vmem>>, vector<32x32xf32>
    %c32_4 = arith.constant 32 : index
    %c32_5 = arith.constant 32 : index
    %4 = vector.load %arg2[%c32_4, %c32_5] : memref<80x128xf32, #tpu.memory_space<vmem>>, vector<32x16xf32>
    %c32_6 = arith.constant 32 : index
    %c48 = arith.constant 48 : index
    %5 = vector.load %arg2[%c32_6, %c48] : memref<80x128xf32, #tpu.memory_space<vmem>>, vector<32x20xf32>
    %c32_7 = arith.constant 32 : index
    %c68 = arith.constant 68 : index
    %6 = vector.load %arg2[%c32_7, %c68] : memref<80x128xf32, #tpu.memory_space<vmem>>, vector<32x2xf32>
    %c32_8 = arith.constant 32 : index
    %c70 = arith.constant 70 : index
    %7 = vector.load %arg2[%c32_8, %c70] : memref<80x128xf32, #tpu.memory_space<vmem>>, vector<32x2xf32>
    %c32_9 = arith.constant 32 : index
    %c72 = arith.constant 72 : index
    %8 = vector.load %arg2[%c32_9, %c72] : memref<80x128xf32, #tpu.memory_space<vmem>>, vector<20x16xf32>
    %c52 = arith.constant 52 : index
    %c88 = arith.constant 88 : index
    %9 = vector.load %arg2[%c52, %c88] : memref<80x128xf32, #tpu.memory_space<vmem>>, vector<1x2xf32>
    %c64_10 = arith.constant 64 : index
    %c32_11 = arith.constant 32 : index
    %10 = vector.load %arg2[%c64_10, %c32_11] : memref<80x128xf32, #tpu.memory_space<vmem>>, vector<2x16xf32>
    %c64_12 = arith.constant 64 : index
    %c48_13 = arith.constant 48 : index
    %11 = vector.load %arg2[%c64_12, %c48_13] : memref<80x128xf32, #tpu.memory_space<vmem>>, vector<2x20xf32>
    %c0_14 = arith.constant 0 : index
    %c0_15 = arith.constant 0 : index
    %12 = vector.load %arg1[%c0_14, %c0_15] : memref<36x80xf32, #tpu.memory_space<vmem>>, vector<36x80xf32>
    %cst = arith.constant dense<0.000000e+00> : vector<36x32xf32>
    %13 = tpu.matmul %12, %0, %cst {dimension_numbers = #tpu.dot_dimension_numbers<[1], [0], [0], [1], [0, 0, 1, 1], [], []>} : vector<36x80xf32>, vector<80x32xf32>, vector<36x32xf32> -> vector<36x32xf32>
    %14 = math.tanh %13 : vector<36x32xf32>
    %15 = vector.extract_strided_slice %14 {offsets = [0, 0], sizes = [16, 32], strides = [1, 1]} : vector<36x32xf32> to vector<16x32xf32>
    %16 = vector.extract_strided_slice %14 {offsets = [16, 0], sizes = [20, 32], strides = [1, 1]} : vector<36x32xf32> to vector<20x32xf32>
    %17 = tpu.transpose %14, [1, 0] : vector<36x32xf32> -> vector<32x36xf32>
    %18 = vector.extract_strided_slice %17 {offsets = [0, 0], sizes = [32, 16], strides = [1, 1]} : vector<32x36xf32> to vector<32x16xf32>
    %19 = vector.extract_strided_slice %17 {offsets = [0, 16], sizes = [32, 20], strides = [1, 1]} : vector<32x36xf32> to vector<32x20xf32>
    %cst_16 = arith.constant dense<0.000000e+00> : vector<20x32xf32>
    %20 = tpu.matmul %16, %1, %cst_16 {dimension_numbers = #tpu.dot_dimension_numbers<[1], [0], [0], [1], [0, 0, 1, 1], [], []>} : vector<20x32xf32>, vector<32x32xf32>, vector<20x32xf32> -> vector<20x32xf32>
    %cst_17 = arith.constant dense<0.000000e+00> : vector<20x16xf32>
    %21 = tpu.matmul %20, %18, %cst_17 {dimension_numbers = #tpu.dot_dimension_numbers<[1], [0], [0], [1], [0, 0, 1, 1], [], []>} : vector<20x32xf32>, vector<32x16xf32>, vector<20x16xf32> -> vector<20x16xf32>
    %22 = math.tanh %21 : vector<20x16xf32>
    %23 = arith.mulf %22, %8 : vector<20x16xf32>
    %cst_18 = arith.constant dense<0.000000e+00> : vector<32x16xf32>
    %24 = tpu.matmul %2, %18, %cst_18 {dimension_numbers = #tpu.dot_dimension_numbers<[1], [0], [0], [1], [0, 0, 1, 1], [], []>} : vector<32x32xf32>, vector<32x16xf32>, vector<32x16xf32> -> vector<32x16xf32>
    %cst_19 = arith.constant dense<0.000000e+00> : vector<32x20xf32>
    %25 = tpu.matmul %3, %19, %cst_19 {dimension_numbers = #tpu.dot_dimension_numbers<[1], [0], [0], [1], [0, 0, 1, 1], [], []>} : vector<32x32xf32>, vector<32x20xf32>, vector<32x20xf32> -> vector<32x20xf32>
    %cst_20 = arith.constant dense<0.000000e+00> : vector<32x16xf32>
    %26 = tpu.matmul %25, %23, %cst_20 {dimension_numbers = #tpu.dot_dimension_numbers<[1], [0], [0], [1], [0, 0, 1, 1], [], []>} : vector<32x20xf32>, vector<20x16xf32>, vector<32x16xf32> -> vector<32x16xf32>
    %27 = arith.addf %24, %26 : vector<32x16xf32>
    %28 = math.tanh %27 : vector<32x16xf32>
    %cst_21 = arith.constant dense<0.000000e+00> : vector<32x20xf32>
    %29 = tpu.matmul %24, %23, %cst_21 {dimension_numbers = #tpu.dot_dimension_numbers<[1], [1], [0], [0], [0, 0, 1, 0], [], []>} : vector<32x16xf32>, vector<20x16xf32>, vector<32x20xf32> -> vector<32x20xf32>
    %30 = arith.addf %25, %29 : vector<32x20xf32>
    %31 = math.tanh %30 : vector<32x20xf32>
    %32 = arith.mulf %4, %28 : vector<32x16xf32>
    %cst_22 = arith.constant dense<0.000000e+00> : vector<16xf32>
    %33 = vector.multi_reduction <add>, %32, %cst_22 [0] : vector<32x16xf32> to vector<16xf32>
    %34 = vector.shape_cast %33 : vector<16xf32> to vector<1x16xf32>
    %35 = arith.mulf %5, %31 : vector<32x20xf32>
    %cst_23 = arith.constant dense<0.000000e+00> : vector<20xf32>
    %36 = vector.multi_reduction <add>, %35, %cst_23 [0] : vector<32x20xf32> to vector<20xf32>
    %37 = vector.shape_cast %36 : vector<20xf32> to vector<1x20xf32>
    %cst_24 = arith.constant dense<0xFF800000> : vector<1xf32>
    %38 = vector.multi_reduction <maximumf>, %34, %cst_24 [1] : vector<1x16xf32> to vector<1xf32>
    %39 = vector.shape_cast %38 : vector<1xf32> to vector<1x1xf32>
    %40 = vector.broadcast %39 : vector<1x1xf32> to vector<1x16xf32>
    %41 = arith.subf %34, %40 : vector<1x16xf32>
    %42 = math.exp %41 : vector<1x16xf32>
    %43 = vector.broadcast %42 : vector<1x16xf32> to vector<2x16xf32>
    %44 = arith.mulf %10, %43 : vector<2x16xf32>
    %cst_25 = arith.constant dense<0.000000e+00> : vector<2xf32>
    %45 = vector.multi_reduction <add>, %44, %cst_25 [1] : vector<2x16xf32> to vector<2xf32>
    %46 = vector.shape_cast %45 : vector<2xf32> to vector<2x1xf32>
    %47 = tpu.reciprocal %46 {approx = true} : vector<2x1xf32> -> vector<2x1xf32>
    %48 = vector.broadcast %47 : vector<2x1xf32> to vector<2x16xf32>
    %49 = arith.mulf %44, %48 : vector<2x16xf32>
    %cst_26 = arith.constant dense<0xFF800000> : vector<1xf32>
    %50 = vector.multi_reduction <maximumf>, %37, %cst_26 [1] : vector<1x20xf32> to vector<1xf32>
    %51 = vector.shape_cast %50 : vector<1xf32> to vector<1x1xf32>
    %52 = vector.broadcast %51 : vector<1x1xf32> to vector<1x20xf32>
    %53 = arith.subf %37, %52 : vector<1x20xf32>
    %54 = math.exp %53 : vector<1x20xf32>
    %55 = vector.broadcast %54 : vector<1x20xf32> to vector<2x20xf32>
    %56 = arith.mulf %11, %55 : vector<2x20xf32>
    %cst_27 = arith.constant dense<0.000000e+00> : vector<2xf32>
    %57 = vector.multi_reduction <add>, %56, %cst_27 [1] : vector<2x20xf32> to vector<2xf32>
    %58 = vector.shape_cast %57 : vector<2xf32> to vector<2x1xf32>
    %59 = tpu.reciprocal %58 {approx = true} : vector<2x1xf32> -> vector<2x1xf32>
    %60 = vector.broadcast %59 : vector<2x1xf32> to vector<2x20xf32>
    %61 = arith.mulf %56, %60 : vector<2x20xf32>
    %cst_28 = arith.constant dense<0.000000e+00> : vector<2x32xf32>
    %62 = tpu.matmul %49, %15, %cst_28 {dimension_numbers = #tpu.dot_dimension_numbers<[1], [0], [0], [1], [0, 0, 1, 1], [], []>} : vector<2x16xf32>, vector<16x32xf32>, vector<2x32xf32> -> vector<2x32xf32>
    %cst_29 = arith.constant dense<0.000000e+00> : vector<2x32xf32>
    %63 = tpu.matmul %61, %16, %cst_29 {dimension_numbers = #tpu.dot_dimension_numbers<[1], [0], [0], [1], [0, 0, 1, 1], [], []>} : vector<2x20xf32>, vector<20x32xf32>, vector<2x32xf32> -> vector<2x32xf32>
    %cst_30 = arith.constant dense<0.000000e+00> : vector<2x2xf32>
    %64 = tpu.matmul %62, %6, %cst_30 {dimension_numbers = #tpu.dot_dimension_numbers<[1], [0], [0], [1], [0, 0, 1, 1], [], []>} : vector<2x32xf32>, vector<32x2xf32>, vector<2x2xf32> -> vector<2x2xf32>
    %cst_31 = arith.constant dense<0.000000e+00> : vector<2x2xf32>
    %65 = tpu.matmul %63, %7, %cst_31 {dimension_numbers = #tpu.dot_dimension_numbers<[1], [0], [0], [1], [0, 0, 1, 1], [], []>} : vector<2x32xf32>, vector<32x2xf32>, vector<2x2xf32> -> vector<2x2xf32>
    %66 = arith.addf %64, %65 : vector<2x2xf32>
    %67 = vector.broadcast %9 : vector<1x2xf32> to vector<2x2xf32>
    %68 = arith.addf %66, %67 : vector<2x2xf32>
    %69 = vector.extract_strided_slice %49 {offsets = [0, 0], sizes = [2, 8], strides = [1, 1]} : vector<2x16xf32> to vector<2x8xf32>
    %70 = vector.extract_strided_slice %49 {offsets = [0, 8], sizes = [2, 8], strides = [1, 1]} : vector<2x16xf32> to vector<2x8xf32>
    %71 = arith.addf %69, %70 : vector<2x8xf32>
    %72 = vector.extract_strided_slice %61 {offsets = [0, 0], sizes = [2, 10], strides = [1, 1]} : vector<2x20xf32> to vector<2x10xf32>
    %73 = vector.extract_strided_slice %61 {offsets = [0, 10], sizes = [2, 10], strides = [1, 1]} : vector<2x20xf32> to vector<2x10xf32>
    %74 = arith.addf %72, %73 : vector<2x10xf32>
    %cst_32 = arith.constant 0.000000e+00 : f32
    %75 = vector.broadcast %cst_32 : f32 to vector<2x108xf32>
    %76 = tpu.concatenate %68, %71, %74, %75 in 1 : vector<2x2xf32>, vector<2x8xf32>, vector<2x10xf32>, vector<2x108xf32> -> vector<2x128xf32>
    %c0_33 = arith.constant 0 : index
    %c0_34 = arith.constant 0 : index
    %77 = vector.load %arg3[%c0_33, %c0_34] : memref<2x128xf32, #tpu.memory_space<vmem>>, vector<2x128xf32>
    tpu.vector_store %arg3[%c0_33, %c0_34], %76 {strides = array<i32>} : memref<2x128xf32, #tpu.memory_space<vmem>>, vector<2x128xf32>,
    return
  }
  func.func @transform_0(%arg0: i32) -> (i32, i32) {
    %c0_i32 = arith.constant 0 : i32
    %c0_i32_0 = arith.constant 0 : i32
    %c0_i32_1 = arith.constant 0 : i32
    return %c0_i32, %c0_i32_0 : i32, i32
  }
  func.func @transform_1(%arg0: i32) -> (i32, i32) {
    %c0_i32 = arith.constant 0 : i32
    %c0_i32_0 = arith.constant 0 : i32
    %c0_i32_1 = arith.constant 0 : i32
    return %c0_i32, %c0_i32_0 : i32, i32
  }
  func.func @transform_2(%arg0: i32) -> (i32, i32) {
    %c0_i32 = arith.constant 0 : i32
    %c0_i32_0 = arith.constant 0 : i32
    %c0_i32_1 = arith.constant 0 : i32
    return %c0_i32, %c0_i32_0 : i32, i32
  }
}

</mosaic_0001>

<llo_original>
// kernel: hyphen_forward.1
$region0: #{hyphen_forward.1}
  #allocation0 [shape = 'u32[]', space=smem, size = 0x4, offset = 0x4, fixed_abs, tag = 'smem constant byte address 0x4 - core index']
  #allocation1 [shape = 'u32[144,128]{1,0:T(1,128)}', space=vmem, size = 0x12000, scoped, tag = 'internal scratch']
  %s0 = inlined_call_operand.vmem [shape: f32[36,80], index: 0, kind: input, shape index: {}]
  %s1 = inlined_call_operand.vmem [shape: f32[80,128], index: 1, kind: input, shape index: {}]
  %s2 = inlined_call_operand.vmem [shape: f32[2,128], index: 2, kind: output, shape index: {}]
  %s3 = sld [smem:[#allocation0]]
  $region18: #{hyphen_forward.1} parent=0
    _
  %s5 = ssub.s32 1, %s3
  %s6 = scalar_select 0, %s5, %s3
  // Predicated region
  $region2: #{hyphen_forward.1} parent=0 // pred_check
    _
  $region3: #{hyphen_forward.1} parent=0 // pred_check_branch
    %8 = sbr.rel (0) target = $region5
  $region4: #{hyphen_forward.1} parent=0 // pred_region
    _
  $region5: #{hyphen_forward.1} parent=0 // pred_fallthru
    _
  // Predicated region
  $region6: #{hyphen_forward.1} parent=0 // pred_check
    _
  $region7: #{hyphen_forward.1} parent=0 // pred_check_branch
    %10 = sbr.rel (0) target = $region9
  $region8: #{hyphen_forward.1} parent=0 // pred_region
    _
  $region9: #{hyphen_forward.1} parent=0 // pred_fallthru
    _
  %v11 = vld [vmem:[%s1] sm:$0xff]
  %v12 = vld [vmem:[%s1 + $0x8] sm:$0xff]
  %v13 = vld [vmem:[%s1 + $0x10] sm:$0xff]
  %v14 = vld [vmem:[%s1 + $0x18] sm:$0xff]
  %v15 = vld [vmem:[%s1 + $0x20] sm:$0xff]
  %v16 = vld [vmem:[%s1 + $0x28] sm:$0xff]
  %v17 = vld [vmem:[%s1 + $0x30] sm:$0xff]
  %v18 = vld [vmem:[%s1 + $0x38] sm:$0xff]
  %v19 = vld [vmem:[%s1 + $0x40] sm:$0xff]
  %v20 = vld [vmem:[%s1 + $0x48] sm:$0xff]
  %v21 = vld [vmem:[%s1] sm:$0xff]
  %v22 = vld [vmem:[%s1 + $0x8] sm:$0xff]
  %v23 = vld [vmem:[%s1 + $0x10] sm:$0xff]
  %v24 = vld [vmem:[%s1 + $0x18] sm:$0xff]
  %v25 = vld [vmem:[%s1 + $0x20] sm:$0xff]
  %v26 = vld [vmem:[%s1 + $0x28] sm:$0xff]
  %v27 = vld [vmem:[%s1 + $0x30] sm:$0xff]
  %v28 = vld [vmem:[%s1 + $0x38] sm:$0xff]
  %v29 = vld [vmem:[%s1 + $0x30] sm:$0xf]
  %v30 = vld [vmem:[%s1 + $0x34] sm:$0x1]
  %v31 = vld [vmem:[%s1 + $0x40] sm:$0x3]
  %v32 = vld [vmem:[%s0] sm:$0xff]
  %v33 = vld [vmem:[%s0 + $0x8] sm:$0xff]
  %v34 = vld [vmem:[%s0 + $0x10] sm:$0xff]
  %v35 = vld [vmem:[%s0 + $0x18] sm:$0xff]
  %v36 = vld [vmem:[%s0 + $0x20] sm:$0xf]
  %vm37 = vcmask 654336
  %v39 = vsel %vm37, %v32, 0
  %v42 = vsel %vm37, %v33, 0
  %v45 = vsel %vm37, %v34, 0
  %v48 = vsel %vm37, %v35, 0
  %v51 = vsel %vm37, %v36, 0
  %53 = vmatprep.subr.mxu0 0.0
  %54 = vmatpush1.msra.mxu0 %v11
  %55 = vmatprep.subr.mxu0 0.0
  %56 = vmatpush1.msra.mxu0 %v12
  %57 = vmatprep.subr.mxu0 0.0
  %58 = vmatpush1.msra.mxu0 %v13
  %59 = vmatprep.subr.mxu0 0.0
  %60 = vmatpush1.msra.mxu0 %v14
  %61 = vmatprep.subr.mxu0 0.0
  %62 = vmatpush1.msra.mxu0 %v15
  %63 = vmatprep.subr.mxu0 0.0
  %64 = vmatpush1.msra.mxu0 %v16
  %65 = vmatprep.subr.mxu0 0.0
  %66 = vmatpush1.msra.mxu0 %v17
  %67 = vmatprep.subr.mxu0 0.0
  %68 = vmatpush1.msra.mxu0 %v18
  %69 = vmatprep.subr.mxu0 0.0
  %70 = vmatpush1.msra.mxu0 %v19
  %71 = vmatprep.subr.mxu0 0.0
  %72 = vmatpush1.msra.mxu0 %v20
  %73 = vmatprep.subr.mxu0 0.0
  %74 = vmatpush1.msra.mxu0 0.0
  %75 = vmatprep.subr.mxu0 0.0
  %76 = vmatpush1.msra.mxu0 0.0
  %77 = vmatprep.subr.mxu0 0.0
  %78 = vmatpush1.msra.mxu0 0.0
  %79 = vmatprep.subr.mxu0 0.0
  %80 = vmatpush1.msra.mxu0 0.0
  %81 = vmatprep.subr.mxu0 0.0
  %82 = vmatpush1.msra.mxu0 0.0
  %83 = vmatprep.subr.mxu0 0.0
  %84 = vmatpush1.msra.mxu0 0.0
  %85 = vmatprep.subr.mxu0 0.0
  %86 = vmatpush1.msra.mxu0 0.0
  %87 = vmatprep.subr.mxu0 0.0
  %88 = vmatpush1.msra.mxu0 0.0
  %89 = vmatprep.subr.mxu0 0.0
  %90 = vmatpush1.msra.mxu0 0.0
  %91 = vmatprep.subr.mxu0 0.0
  %92 = vmatpush1.msra.mxu0 0.0
  %93 = vmatprep.subr.mxu0 0.0
  %94 = vmatpush1.msra.mxu0 0.0
  %95 = vmatprep.subr.mxu0 0.0
  %96 = vmatpush1.msra.mxu0 0.0
  %97 = vmatprep.subr.mxu0 0.0
  %98 = vmatpush1.msra.mxu0 0.0
  %99 = vmatprep.subr.mxu0 0.0
  %100 = vmatpush1.msra.mxu0 0.0
  %101 = vmatprep.subr.mxu0 0.0
  %102 = vmatpush1.msra.mxu0 0.0
  %103 = vmatprep.subr.mxu0 0.0
  %104 = vmatpush1.msra.mxu0 0.0
  %105 = vmatprep.subr.mxu0 0.0
  %106 = vmatpush1.msra.mxu0 0.0
  %107 = vmatprep.subr.mxu0 0.0
  %108 = vmatpush1.msra.mxu0 0.0
  %109 = vmatprep.subr.mxu0 0.0
  %110 = vmatpush1.msra.mxu0 0.0
  %111 = vmatprep.subr.mxu0 0.0
  %112 = vmatpush1.msra.mxu0 0.0
  %113 = vmatprep.subr.mxu0 0.0
  %114 = vmatpush1.msra.mxu0 0.0
  %115 = vmatprep.subr.mxu0 0.0
  %116 = vmatpush1.msra.mxu0 0.0
  %117 = vmatprep.mubr.f32.mxu0 0.0
  %118 = vmatmul.mubr.f32.gmra.mrb[0].mxu0 %v39
  %v119 = vpop.f32.mrb[0].mxu0
  %v120 = vadd.f32 0.0, %v119
  %v121 = vpop.f32.mrb[0].mxu0
  %122 = vmatprep.mubr.f32.mxu0 0.0
  %123 = vmatmul.mubr.f32.gmra.mrb[0].mxu0 %v42
  %v124 = vpop.f32.mrb[0].mxu0
  %v125 = vadd.f32 0.0, %v124
  %v126 = vpop.f32.mrb[0].mxu0
  %127 = vmatprep.mubr.f32.mxu0 0.0
  %128 = vmatmul.mubr.f32.gmra.mrb[0].mxu0 %v45
  %v129 = vpop.f32.mrb[0].mxu0
  %v130 = vadd.f32 0.0, %v129
  %v131 = vpop.f32.mrb[0].mxu0
  %132 = vmatprep.mubr.f32.mxu0 0.0
  %133 = vmatmul.mubr.f32.gmra.mrb[0].mxu0 %v48
  %v134 = vpop.f32.mrb[0].mxu0
  %v135 = vadd.f32 0.0, %v134
  %v136 = vpop.f32.mrb[0].mxu0
  %137 = vmatprep.mubr.f32.mxu0 0.0
  %138 = vmatmul.mubr.f32.gmra.mrb[0].mxu0 %v51
  %v139 = vpop.f32.mrb[0].mxu0
  %v140 = vadd.f32 0.0, %v139
  %v141 = vpop.f32.mrb[0].mxu0
  %142 = vdwg.mxu0
  %v143 = vtanh.pop %v120
  %v144 = vtanh.pop %v125
  %v145 = vtanh.pop %v130
  %v146 = vtanh.pop %v135
  %v147 = vtanh.pop %v140
  %148 = vxpose.xlu0.b32.start [1/16] %v143, 128
  %149 = vxpose.xlu0.b32.cont [2/16] %v144, 128
  %150 = vxpose.xlu0.b32.cont [3/16] %v145, 128
  %151 = vxpose.xlu0.b32.cont [4/16] %v146, 128
  %152 = vxpose.xlu0.b32.cont [5/16] %v147, 128
  %153 = vxpose.xlu0.b32.cont [6/16] 0.0, 128
  %154 = vxpose.xlu0.b32.cont [7/16] 0.0, 128
  %155 = vxpose.xlu0.b32.cont [8/16] 0.0, 128
  %156 = vxpose.xlu0.b32.cont [9/16] 0.0, 128
  %157 = vxpose.xlu0.b32.cont [10/16] 0.0, 128
  %158 = vxpose.xlu0.b32.cont [11/16] 0.0, 128
  %159 = vxpose.xlu0.b32.cont [12/16] 0.0, 128
  %160 = vxpose.xlu0.b32.cont [13/16] 0.0, 128
  %161 = vxpose.xlu0.b32.cont [14/16] 0.0, 128
  %162 = vxpose.xlu0.b32.cont [15/16] 0.0, 128
  %163 = vxpose.xlu0.b32.end [16/16] 0.0, 128
  %v164 = vpop.trf.xlu0
  %v165 = vpop.trf.xlu0
  %v166 = vpop.trf.xlu0
  %v167 = vpop.trf.xlu0
  %v168 = vpop.trf.xlu0
  %v169 = vpop.trf.xlu0
  %v170 = vpop.trf.xlu0
  %v171 = vpop.trf.xlu0
  %v172 = vpop.trf.xlu0
  %v173 = vpop.trf.xlu0
  %v174 = vpop.trf.xlu0
  %v175 = vpop.trf.xlu0
  %v176 = vpop.trf.xlu0
  %v177 = vpop.trf.xlu0
  %v178 = vpop.trf.xlu0
  %v179 = vpop.trf.xlu0
  %184 = vrot.lane.b32.xlu0 %v21, 96
  %v185 = vpop.permute.xlu0 %184
  %186 = vrot.lane.b32.xlu0 %v22, 96
  %v187 = vpop.permute.xlu0 %186
  %188 = vrot.lane.b32.xlu0 %v23, 96
  %v189 = vpop.permute.xlu0 %188
  %190 = vrot.lane.b32.xlu0 %v24, 96
  %v191 = vpop.permute.xlu0 %190
  %vm196 = vcmask 261120
  %v198 = vsel %vm196, %v145, 0
  %v201 = vsel %vm196, %v146, 0
  %v204 = vsel %vm196, %v147, 0
  %206 = vmatprep.subr.mxu0 0.0
  %207 = vmatpush1.msra.mxu0 %v185
  %208 = vmatprep.subr.mxu0 0.0
  %209 = vmatpush1.msra.mxu0 %v187
  %210 = vmatprep.subr.mxu0 0.0
  %211 = vmatpush1.msra.mxu0 %v189
  %212 = vmatprep.subr.mxu0 0.0
  %213 = vmatpush1.msra.mxu0 %v191
  %214 = vmatprep.subr.mxu0 0.0
  %215 = vmatpush1.msra.mxu0 0.0
  %216 = vmatprep.subr.mxu0 0.0
  %217 = vmatpush1.msra.mxu0 0.0
  %218 = vmatprep.subr.mxu0 0.0
  %219 = vmatpush1.msra.mxu0 0.0
  %220 = vmatprep.subr.mxu0 0.0
  %221 = vmatpush1.msra.mxu0 0.0
  %222 = vmatprep.subr.mxu0 0.0
  %223 = vmatpush1.msra.mxu0 0.0
  %224 = vmatprep.subr.mxu0 0.0
  %225 = vmatpush1.msra.mxu0 0.0
  %226 = vmatprep.subr.mxu0 0.0
  %227 = vmatpush1.msra.mxu0 0.0
  %228 = vmatprep.subr.mxu0 0.0
  %229 = vmatpush1.msra.mxu0 0.0
  %230 = vmatprep.subr.mxu0 0.0
  %231 = vmatpush1.msra.mxu0 0.0
  %232 = vmatprep.subr.mxu0 0.0
  %233 = vmatpush1.msra.mxu0 0.0
  %234 = vmatprep.subr.mxu0 0.0
  %235 = vmatpush1.msra.mxu0 0.0
  %236 = vmatprep.subr.mxu0 0.0
  %237 = vmatpush1.msra.mxu0 0.0
  %238 = vmatprep.subr.mxu0 0.0
  %239 = vmatpush1.msra.mxu0 0.0
  %240 = vmatprep.subr.mxu0 0.0
  %241 = vmatpush1.msra.mxu0 0.0
  %242 = vmatprep.subr.mxu0 0.0
  %243 = vmatpush1.msra.mxu0 0.0
  %244 = vmatprep.subr.mxu0 0.0
  %245 = vmatpush1.msra.mxu0 0.0
  %246 = vmatprep.subr.mxu0 0.0
  %247 = vmatpush1.msra.mxu0 0.0
  %248 = vmatprep.subr.mxu0 0.0
  %249 = vmatpush1.msra.mxu0 0.0
  %250 = vmatprep.subr.mxu0 0.0
  %251 = vmatpush1.msra.mxu0 0.0
  %252 = vmatprep.subr.mxu0 0.0
  %253 = vmatpush1.msra.mxu0 0.0
  %254 = vmatprep.subr.mxu0 0.0
  %255 = vmatpush1.msra.mxu0 0.0
  %256 = vmatprep.subr.mxu0 0.0
  %257 = vmatpush1.msra.mxu0 0.0
  %258 = vmatprep.subr.mxu0 0.0
  %259 = vmatpush1.msra.mxu0 0.0
  %260 = vmatprep.subr.mxu0 0.0
  %261 = vmatpush1.msra.mxu0 0.0
  %262 = vmatprep.subr.mxu0 0.0
  %263 = vmatpush1.msra.mxu0 0.0
  %264 = vmatprep.subr.mxu0 0.0
  %265 = vmatpush1.msra.mxu0 0.0
  %266 = vmatprep.subr.mxu0 0.0
  %267 = vmatpush1.msra.mxu0 0.0
  %268 = vmatprep.subr.mxu0 0.0
  %269 = vmatpush1.msra.mxu0 0.0
  %270 = vmatprep.mubr.f32.mxu0 0.0
  %271 = vmatmul.mubr.f32.gmra.mrb[0].mxu0 %v198
  %v272 = vpop.f32.mrb[0].mxu0
  %v273 = vadd.f32 0.0, %v272
  %v274 = vpop.f32.mrb[0].mxu0
  %275 = vmatprep.mubr.f32.mxu0 0.0
  %276 = vmatmul.mubr.f32.gmra.mrb[0].mxu0 %v201
  %v277 = vpop.f32.mrb[0].mxu0
  %v278 = vadd.f32 0.0, %v277
  %v279 = vpop.f32.mrb[0].mxu0
  %280 = vmatprep.mubr.f32.mxu0 0.0
  %281 = vmatmul.mubr.f32.gmra.mrb[0].mxu0 %v204
  %v282 = vpop.f32.mrb[0].mxu0
  %v283 = vadd.f32 0.0, %v282
  %v284 = vpop.f32.mrb[0].mxu0
  %285 = vdwg.mxu0
  %v287 = vsel %vm196, %v273, 0
  %v290 = vsel %vm196, %v278, 0
  %v293 = vsel %vm196, %v283, 0
  %295 = vmatprep.subr.mxu0 0.0
  %296 = vmatpush1.msra.mxu0 %v164
  %297 = vmatprep.subr.mxu0 0.0
  %298 = vmatpush1.msra.mxu0 %v165
  %299 = vmatprep.subr.mxu0 0.0
  %300 = vmatpush1.msra.mxu0 %v166
  %301 = vmatprep.subr.mxu0 0.0
  %302 = vmatpush1.msra.mxu0 %v167
  %303 = vmatprep.subr.mxu0 0.0
  %304 = vmatpush1.msra.mxu0 0.0
  %305 = vmatprep.subr.mxu0 0.0
  %306 = vmatpush1.msra.mxu0 0.0
  %307 = vmatprep.subr.mxu0 0.0
  %308 = vmatpush1.msra.mxu0 0.0
  %309 = vmatprep.subr.mxu0 0.0
  %310 = vmatpush1.msra.mxu0 0.0
  %311 = vmatprep.subr.mxu0 0.0
  %312 = vmatpush1.msra.mxu0 0.0
  %313 = vmatprep.subr.mxu0 0.0
  %314 = vmatpush1.msra.mxu0 0.0
  %315 = vmatprep.subr.mxu0 0.0
  %316 = vmatpush1.msra.mxu0 0.0
  %317 = vmatprep.subr.mxu0 0.0
  %318 = vmatpush1.msra.mxu0 0.0
  %319 = vmatprep.subr.mxu0 0.0
  %320 = vmatpush1.msra.mxu0 0.0
  %321 = vmatprep.subr.mxu0 0.0
  %322 = vmatpush1.msra.mxu0 0.0
  %323 = vmatprep.subr.mxu0 0.0
  %324 = vmatpush1.msra.mxu0 0.0
  %325 = vmatprep.subr.mxu0 0.0
  %326 = vmatpush1.msra.mxu0 0.0
  %327 = vmatprep.subr.mxu0 0.0
  %328 = vmatpush1.msra.mxu0 0.0
  %329 = vmatprep.subr.mxu0 0.0
  %330 = vmatpush1.msra.mxu0 0.0
  %331 = vmatprep.subr.mxu0 0.0
  %332 = vmatpush1.msra.mxu0 0.0
  %333 = vmatprep.subr.mxu0 0.0
  %334 = vmatpush1.msra.mxu0 0.0
  %335 = vmatprep.subr.mxu0 0.0
  %336 = vmatpush1.msra.mxu0 0.0
  %337 = vmatprep.subr.mxu0 0.0
  %338 = vmatpush1.msra.mxu0 0.0
  %339 = vmatprep.subr.mxu0 0.0
  %340 = vmatpush1.msra.mxu0 0.0
  %341 = vmatprep.subr.mxu0 0.0
  %342 = vmatpush1.msra.mxu0 0.0
  %343 = vmatprep.subr.mxu0 0.0
  %344 = vmatpush1.msra.mxu0 0.0
  %345 = vmatprep.subr.mxu0 0.0
  %346 = vmatpush1.msra.mxu0 0.0
  %347 = vmatprep.subr.mxu0 0.0
  %348 = vmatpush1.msra.mxu0 0.0
  %349 = vmatprep.subr.mxu0 0.0
  %350 = vmatpush1.msra.mxu0 0.0
  %351 = vmatprep.subr.mxu0 0.0
  %352 = vmatpush1.msra.mxu0 0.0
  %353 = vmatprep.subr.mxu0 0.0
  %354 = vmatpush1.msra.mxu0 0.0
  %355 = vmatprep.subr.mxu0 0.0
  %356 = vmatpush1.msra.mxu0 0.0
  %357 = vmatprep.subr.mxu0 0.0
  %358 = vmatpush1.msra.mxu0 0.0
  %359 = vmatprep.mubr.f32.mxu0 0.0
  %360 = vmatmul.mubr.f32.gmra.mrb[0].mxu0 %v287
  %v361 = vpop.f32.mrb[0].mxu0
  %v362 = vadd.f32 0.0, %v361
  %v363 = vpop.f32.mrb[0].mxu0
  %364 = vmatprep.mubr.f32.mxu0 0.0
  %365 = vmatmul.mubr.f32.gmra.mrb[0].mxu0 %v290
  %v366 = vpop.f32.mrb[0].mxu0
  %v367 = vadd.f32 0.0, %v366
  %v368 = vpop.f32.mrb[0].mxu0
  %369 = vmatprep.mubr.f32.mxu0 0.0
  %370 = vmatmul.mubr.f32.gmra.mrb[0].mxu0 %v293
  %v371 = vpop.f32.mrb[0].mxu0
  %v372 = vadd.f32 0.0, %v371
  %v373 = vpop.f32.mrb[0].mxu0
  %374 = vdwg.mxu0
  %v375 = vtanh.pop %v362
  %v376 = vtanh.pop %v367
  %v377 = vtanh.pop %v372
  %381 = vrot.lane.b32.xlu0 %v25, 56
  %v382 = vpop.permute.xlu0 %381
  %383 = vrot.lane.b32.xlu0 %v26, 56
  %v384 = vpop.permute.xlu0 %383
  %385 = vrot.lane.b32.xlu0 %v29, 56
  %v386 = vpop.permute.xlu0 %385
  %v390 = vmul.f32 %v375, %v382
  %v391 = vmul.f32 %v376, %v384
  %v392 = vmul.f32 %v377, %v386
  %393 = vrot.lane.b32.xlu0 %v21, 64
  %v394 = vpop.permute.xlu0 %393
  %395 = vrot.lane.b32.xlu0 %v22, 64
  %v396 = vpop.permute.xlu0 %395
  %397 = vrot.lane.b32.xlu0 %v23, 64
  %v398 = vpop.permute.xlu0 %397
  %399 = vrot.lane.b32.xlu0 %v24, 64
  %v400 = vpop.permute.xlu0 %399
  %v401 = vsel %vm196, %v394, 0
  %v403 = vsel %vm196, %v396, 0
  %v405 = vsel %vm196, %v398, 0
  %v407 = vsel %vm196, %v400, 0
  %409 = vmatprep.subr.mxu0 0.0
  %410 = vmatpush1.msra.mxu0 %v164
  %411 = vmatprep.subr.mxu0 0.0
  %412 = vmatpush1.msra.mxu0 %v165
  %413 = vmatprep.subr.mxu0 0.0
  %414 = vmatpush1.msra.mxu0 %v166
  %415 = vmatprep.subr.mxu0 0.0
  %416 = vmatpush1.msra.mxu0 %v167
  %417 = vmatprep.subr.mxu0 0.0
  %418 = vmatpush1.msra.mxu0 0.0
  %419 = vmatprep.subr.mxu0 0.0
  %420 = vmatpush1.msra.mxu0 0.0
  %421 = vmatprep.subr.mxu0 0.0
  %422 = vmatpush1.msra.mxu0 0.0
  %423 = vmatprep.subr.mxu0 0.0
  %424 = vmatpush1.msra.mxu0 0.0
  %425 = vmatprep.subr.mxu0 0.0
  %426 = vmatpush1.msra.mxu0 0.0
  %427 = vmatprep.subr.mxu0 0.0
  %428 = vmatpush1.msra.mxu0 0.0
  %429 = vmatprep.subr.mxu0 0.0
  %430 = vmatpush1.msra.mxu0 0.0
  %431 = vmatprep.subr.mxu0 0.0
  %432 = vmatpush1.msra.mxu0 0.0
  %433 = vmatprep.subr.mxu0 0.0
  %434 = vmatpush1.msra.mxu0 0.0
  %435 = vmatprep.subr.mxu0 0.0
  %436 = vmatpush1.msra.mxu0 0.0
  %437 = vmatprep.subr.mxu0 0.0
  %438 = vmatpush1.msra.mxu0 0.0
  %439 = vmatprep.subr.mxu0 0.0
  %440 = vmatpush1.msra.mxu0 0.0
  %441 = vmatprep.subr.mxu0 0.0
  %442 = vmatpush1.msra.mxu0 0.0
  %443 = vmatprep.subr.mxu0 0.0
  %444 = vmatpush1.msra.mxu0 0.0
  %445 = vmatprep.subr.mxu0 0.0
  %446 = vmatpush1.msra.mxu0 0.0
  %447 = vmatprep.subr.mxu0 0.0
  %448 = vmatpush1.msra.mxu0 0.0
  %449 = vmatprep.subr.mxu0 0.0
  %450 = vmatpush1.msra.mxu0 0.0
  %451 = vmatprep.subr.mxu0 0.0
  %452 = vmatpush1.msra.mxu0 0.0
  %453 = vmatprep.subr.mxu0 0.0
  %454 = vmatpush1.msra.mxu0 0.0
  %455 = vmatprep.subr.mxu0 0.0
  %456 = vmatpush1.msra.mxu0 0.0
  %457 = vmatprep.subr.mxu0 0.0
  %458 = vmatpush1.msra.mxu0 0.0
  %459 = vmatprep.subr.mxu0 0.0
  %460 = vmatpush1.msra.mxu0 0.0
  %461 = vmatprep.subr.mxu0 0.0
  %462 = vmatpush1.msra.mxu0 0.0
  %463 = vmatprep.subr.mxu0 0.0
  %464 = vmatpush1.msra.mxu0 0.0
  %465 = vmatprep.subr.mxu0 0.0
  %466 = vmatpush1.msra.mxu0 0.0
  %467 = vmatprep.subr.mxu0 0.0
  %468 = vmatpush1.msra.mxu0 0.0
  %469 = vmatprep.subr.mxu0 0.0
  %470 = vmatpush1.msra.mxu0 0.0
  %471 = vmatprep.subr.mxu0 0.0
  %472 = vmatpush1.msra.mxu0 0.0
  %473 = vmatprep.mubr.f32.mxu0 0.0
  %474 = vmatmul.mubr.f32.gmra.mrb[0].mxu0 %v401
  %v475 = vpop.f32.mrb[0].mxu0
  %v476 = vadd.f32 0.0, %v475
  %v477 = vpop.f32.mrb[0].mxu0
  %478 = vmatprep.mubr.f32.mxu0 0.0
  %479 = vmatmul.mubr.f32.gmra.mrb[0].mxu0 %v403
  %v480 = vpop.f32.mrb[0].mxu0
  %v481 = vadd.f32 0.0, %v480
  %v482 = vpop.f32.mrb[0].mxu0
  %483 = vmatprep.mubr.f32.mxu0 0.0
  %484 = vmatmul.mubr.f32.gmra.mrb[0].mxu0 %v405
  %v485 = vpop.f32.mrb[0].mxu0
  %v486 = vadd.f32 0.0, %v485
  %v487 = vpop.f32.mrb[0].mxu0
  %488 = vmatprep.mubr.f32.mxu0 0.0
  %489 = vmatmul.mubr.f32.gmra.mrb[0].mxu0 %v407
  %v490 = vpop.f32.mrb[0].mxu0
  %v491 = vadd.f32 0.0, %v490
  %v492 = vpop.f32.mrb[0].mxu0
  %493 = vdwg.mxu0
  %494 = vrot.lane.b32.xlu0 %v21, 32
  %v495 = vpop.permute.xlu0 %494
  %496 = vrot.lane.b32.xlu0 %v22, 32
  %v497 = vpop.permute.xlu0 %496
  %498 = vrot.lane.b32.xlu0 %v23, 32
  %v499 = vpop.permute.xlu0 %498
  %500 = vrot.lane.b32.xlu0 %v24, 32
  %v501 = vpop.permute.xlu0 %500
  %506 = vrot.lane.b32.xlu0 %v164, 112
  %v507 = vpop.permute.xlu0 %506
  %508 = vrot.lane.b32.xlu0 %v165, 112
  %v509 = vpop.permute.xlu0 %508
  %510 = vrot.lane.b32.xlu0 %v166, 112
  %v511 = vpop.permute.xlu0 %510
  %512 = vrot.lane.b32.xlu0 %v167, 112
  %v513 = vpop.permute.xlu0 %512
  %v518 = vsel %vm196, %v495, 0
  %v520 = vsel %vm196, %v497, 0
  %v522 = vsel %vm196, %v499, 0
  %v524 = vsel %vm196, %v501, 0
  %526 = vmatprep.subr.mxu0 0.0
  %527 = vmatpush1.msra.mxu0 %v507
  %528 = vmatprep.subr.mxu0 0.0
  %529 = vmatpush1.msra.mxu0 %v509
  %530 = vmatprep.subr.mxu0 0.0
  %531 = vmatpush1.msra.mxu0 %v511
  %532 = vmatprep.subr.mxu0 0.0
  %533 = vmatpush1.msra.mxu0 %v513
  %534 = vmatprep.subr.mxu0 0.0
  %535 = vmatpush1.msra.mxu0 0.0
  %536 = vmatprep.subr.mxu0 0.0
  %537 = vmatpush1.msra.mxu0 0.0
  %538 = vmatprep.subr.mxu0 0.0
  %539 = vmatpush1.msra.mxu0 0.0
  %540 = vmatprep.subr.mxu0 0.0
  %541 = vmatpush1.msra.mxu0 0.0
  %542 = vmatprep.subr.mxu0 0.0
  %543 = vmatpush1.msra.mxu0 0.0
  %544 = vmatprep.subr.mxu0 0.0
  %545 = vmatpush1.msra.mxu0 0.0
  %546 = vmatprep.subr.mxu0 0.0
  %547 = vmatpush1.msra.mxu0 0.0
  %548 = vmatprep.subr.mxu0 0.0
  %549 = vmatpush1.msra.mxu0 0.0
  %550 = vmatprep.subr.mxu0 0.0
  %551 = vmatpush1.msra.mxu0 0.0
  %552 = vmatprep.subr.mxu0 0.0
  %553 = vmatpush1.msra.mxu0 0.0
  %554 = vmatprep.subr.mxu0 0.0
  %555 = vmatpush1.msra.mxu0 0.0
  %556 = vmatprep.subr.mxu0 0.0
  %557 = vmatpush1.msra.mxu0 0.0
  %558 = vmatprep.subr.mxu0 0.0
  %559 = vmatpush1.msra.mxu0 0.0
  %560 = vmatprep.subr.mxu0 0.0
  %561 = vmatpush1.msra.mxu0 0.0
  %562 = vmatprep.subr.mxu0 0.0
  %563 = vmatpush1.msra.mxu0 0.0
  %564 = vmatprep.subr.mxu0 0.0
  %565 = vmatpush1.msra.mxu0 0.0
  %566 = vmatprep.subr.mxu0 0.0
  %567 = vmatpush1.msra.mxu0 0.0
  %568 = vmatprep.subr.mxu0 0.0
  %569 = vmatpush1.msra.mxu0 0.0
  %570 = vmatprep.subr.mxu0 0.0
  %571 = vmatpush1.msra.mxu0 0.0
  %572 = vmatprep.subr.mxu0 0.0
  %573 = vmatpush1.msra.mxu0 0.0
  %574 = vmatprep.subr.mxu0 0.0
  %575 = vmatpush1.msra.mxu0 0.0
  %576 = vmatprep.subr.mxu0 0.0
  %577 = vmatpush1.msra.mxu0 0.0
  %578 = vmatprep.subr.mxu0 0.0
  %579 = vmatpush1.msra.mxu0 0.0
  %580 = vmatprep.subr.mxu0 0.0
  %581 = vmatpush1.msra.mxu0 0.0
  %582 = vmatprep.subr.mxu0 0.0
  %583 = vmatpush1.msra.mxu0 0.0
  %584 = vmatprep.subr.mxu0 0.0
  %585 = vmatpush1.msra.mxu0 0.0
  %586 = vmatprep.subr.mxu0 0.0
  %587 = vmatpush1.msra.mxu0 0.0
  %588 = vmatprep.subr.mxu0 0.0
  %589 = vmatpush1.msra.mxu0 0.0
  %590 = vmatprep.mubr.f32.mxu0 0.0
  %591 = vmatmul.mubr.f32.gmra.mrb[0].mxu0 %v518
  %v592 = vpop.f32.mrb[0].mxu0
  %v593 = vadd.f32 0.0, %v592
  %v594 = vpop.f32.mrb[0].mxu0
  %595 = vmatprep.mubr.f32.mxu0 0.0
  %596 = vmatmul.mubr.f32.gmra.mrb[0].mxu0 %v520
  %v597 = vpop.f32.mrb[0].mxu0
  %v598 = vadd.f32 0.0, %v597
  %v599 = vpop.f32.mrb[0].mxu0
  %600 = vmatprep.mubr.f32.mxu0 0.0
  %601 = vmatmul.mubr.f32.gmra.mrb[0].mxu0 %v522
  %v602 = vpop.f32.mrb[0].mxu0
  %v603 = vadd.f32 0.0, %v602
  %v604 = vpop.f32.mrb[0].mxu0
  %605 = vmatprep.mubr.f32.mxu0 0.0
  %606 = vmatmul.mubr.f32.gmra.mrb[0].mxu0 %v524
  %v607 = vpop.f32.mrb[0].mxu0
  %v608 = vadd.f32 0.0, %v607
  %v609 = vpop.f32.mrb[0].mxu0
  %610 = vdwg.mxu0
  %vm611 = vcmask 162816
  %v613 = vsel %vm611, %v593, 0
  %v616 = vsel %vm611, %v598, 0
  %v619 = vsel %vm611, %v603, 0
  %v622 = vsel %vm611, %v608, 0
  %vm624 = vcmask 1043456
  %v626 = vsel %vm624, %v392, 0
  %628 = vmatprep.subr.mxu0 0.0
  %629 = vmatpush1.msra.mxu0 %v390
  %630 = vmatprep.subr.mxu0 0.0
  %631 = vmatpush1.msra.mxu0 %v391
  %632 = vmatprep.subr.mxu0 0.0
  %633 = vmatpush1.msra.mxu0 %v626
  %634 = vmatprep.subr.mxu0 0.0
  %635 = vmatpush1.msra.mxu0 0.0
  %636 = vmatprep.subr.mxu0 0.0
  %637 = vmatpush1.msra.mxu0 0.0
  %638 = vmatprep.subr.mxu0 0.0
  %639 = vmatpush1.msra.mxu0 0.0
  %640 = vmatprep.subr.mxu0 0.0
  %641 = vmatpush1.msra.mxu0 0.0
  %642 = vmatprep.subr.mxu0 0.0
  %643 = vmatpush1.msra.mxu0 0.0
  %644 = vmatprep.subr.mxu0 0.0
  %645 = vmatpush1.msra.mxu0 0.0
  %646 = vmatprep.subr.mxu0 0.0
  %647 = vmatpush1.msra.mxu0 0.0
  %648 = vmatprep.subr.mxu0 0.0
  %649 = vmatpush1.msra.mxu0 0.0
  %650 = vmatprep.subr.mxu0 0.0
  %651 = vmatpush1.msra.mxu0 0.0
  %652 = vmatprep.subr.mxu0 0.0
  %653 = vmatpush1.msra.mxu0 0.0
  %654 = vmatprep.subr.mxu0 0.0
  %655 = vmatpush1.msra.mxu0 0.0
  %656 = vmatprep.subr.mxu0 0.0
  %657 = vmatpush1.msra.mxu0 0.0
  %658 = vmatprep.subr.mxu0 0.0
  %659 = vmatpush1.msra.mxu0 0.0
  %660 = vmatprep.subr.mxu0 0.0
  %661 = vmatpush1.msra.mxu0 0.0
  %662 = vmatprep.subr.mxu0 0.0
  %663 = vmatpush1.msra.mxu0 0.0
  %664 = vmatprep.subr.mxu0 0.0
  %665 = vmatpush1.msra.mxu0 0.0
  %666 = vmatprep.subr.mxu0 0.0
  %667 = vmatpush1.msra.mxu0 0.0
  %668 = vmatprep.subr.mxu0 0.0
  %669 = vmatpush1.msra.mxu0 0.0
  %670 = vmatprep.subr.mxu0 0.0
  %671 = vmatpush1.msra.mxu0 0.0
  %672 = vmatprep.subr.mxu0 0.0
  %673 = vmatpush1.msra.mxu0 0.0
  %674 = vmatprep.subr.mxu0 0.0
  %675 = vmatpush1.msra.mxu0 0.0
  %676 = vmatprep.subr.mxu0 0.0
  %677 = vmatpush1.msra.mxu0 0.0
  %678 = vmatprep.subr.mxu0 0.0
  %679 = vmatpush1.msra.mxu0 0.0
  %680 = vmatprep.subr.mxu0 0.0
  %681 = vmatpush1.msra.mxu0 0.0
  %682 = vmatprep.subr.mxu0 0.0
  %683 = vmatpush1.msra.mxu0 0.0
  %684 = vmatprep.subr.mxu0 0.0
  %685 = vmatpush1.msra.mxu0 0.0
  %686 = vmatprep.subr.mxu0 0.0
  %687 = vmatpush1.msra.mxu0 0.0
  %688 = vmatprep.subr.mxu0 0.0
  %689 = vmatpush1.msra.mxu0 0.0
  %690 = vmatprep.subr.mxu0 0.0
  %691 = vmatpush1.msra.mxu0 0.0
  %692 = vmatprep.mubr.f32.mxu0 0.0
  %693 = vmatmul.mubr.f32.gmra.mrb[0].mxu0 %v613
  %v694 = vpop.f32.mrb[0].mxu0
  %v695 = vadd.f32 0.0, %v694
  %v696 = vpop.f32.mrb[0].mxu0
  %697 = vmatprep.mubr.f32.mxu0 0.0
  %698 = vmatmul.mubr.f32.gmra.mrb[0].mxu0 %v616
  %v699 = vpop.f32.mrb[0].mxu0
  %v700 = vadd.f32 0.0, %v699
  %v701 = vpop.f32.mrb[0].mxu0
  %702 = vmatprep.mubr.f32.mxu0 0.0
  %703 = vmatmul.mubr.f32.gmra.mrb[0].mxu0 %v619
  %v704 = vpop.f32.mrb[0].mxu0
  %v705 = vadd.f32 0.0, %v704
  %v706 = vpop.f32.mrb[0].mxu0
  %707 = vmatprep.mubr.f32.mxu0 0.0
  %708 = vmatmul.mubr.f32.gmra.mrb[0].mxu0 %v622
  %v709 = vpop.f32.mrb[0].mxu0
  %v710 = vadd.f32 0.0, %v709
  %v711 = vpop.f32.mrb[0].mxu0
  %712 = vdwg.mxu0
  %v713 = vadd.f32 %v476, %v695
  %v714 = vadd.f32 %v481, %v700
  %v715 = vadd.f32 %v486, %v705
  %v716 = vadd.f32 %v491, %v710
  %v717 = vtanh.pop %v713
  %v718 = vtanh.pop %v714
  %v719 = vtanh.pop %v715
  %v720 = vtanh.pop %v716
  %vm721 = vcmask 130048
  %v723 = vsel %vm721, %v476, 0
  %v726 = vsel %vm721, %v481, 0
  %v729 = vsel %vm721, %v486, 0
  %v732 = vsel %vm721, %v491, 0
  %v735 = vsel %vm721, %v390, 0
  %v738 = vsel %vm721, %v391, 0
  %v740 = vsel %vm721, %v392, 0
  %742 = vmatprep.subr.mxu0 0.0
  %743 = vmatpush1.xpose.msra.mxu0 %v735
  %744 = vmatprep.subr.mxu0 0.0
  %745 = vmatpush1.xpose.msra.mxu0 %v738
  %746 = vmatprep.subr.mxu0 0.0
  %747 = vmatpush1.xpose.msra.mxu0 %v740
  %748 = vmatprep.subr.mxu0 0.0
  %749 = vmatpush1.xpose.msra.mxu0 0.0
  %750 = vmatprep.subr.mxu0 0.0
  %751 = vmatpush1.xpose.msra.mxu0 0.0
  %752 = vmatprep.subr.mxu0 0.0
  %753 = vmatpush1.xpose.msra.mxu0 0.0
  %754 = vmatprep.subr.mxu0 0.0
  %755 = vmatpush1.xpose.msra.mxu0 0.0
  %756 = vmatprep.subr.mxu0 0.0
  %757 = vmatpush1.xpose.msra.mxu0 0.0
  %758 = vmatprep.subr.mxu0 0.0
  %759 = vmatpush1.xpose.msra.mxu0 0.0
  %760 = vmatprep.subr.mxu0 0.0
  %761 = vmatpush1.xpose.msra.mxu0 0.0
  %762 = vmatprep.subr.mxu0 0.0
  %763 = vmatpush1.xpose.msra.mxu0 0.0
  %764 = vmatprep.subr.mxu0 0.0
  %765 = vmatpush1.xpose.msra.mxu0 0.0
  %766 = vmatprep.subr.mxu0 0.0
  %767 = vmatpush1.xpose.msra.mxu0 0.0
  %768 = vmatprep.subr.mxu0 0.0
  %769 = vmatpush1.xpose.msra.mxu0 0.0
  %770 = vmatprep.subr.mxu0 0.0
  %771 = vmatpush1.xpose.msra.mxu0 0.0
  %772 = vmatprep.subr.mxu0 0.0
  %773 = vmatpush1.xpose.msra.mxu0 0.0
  %774 = vmatprep.subr.mxu0 0.0
  %775 = vmatpush1.xpose.msra.mxu0 0.0
  %776 = vmatprep.subr.mxu0 0.0
  %777 = vmatpush1.xpose.msra.mxu0 0.0
  %778 = vmatprep.subr.mxu0 0.0
  %779 = vmatpush1.xpose.msra.mxu0 0.0
  %780 = vmatprep.subr.mxu0 0.0
  %781 = vmatpush1.xpose.msra.mxu0 0.0
  %782 = vmatprep.subr.mxu0 0.0
  %783 = vmatpush1.xpose.msra.mxu0 0.0
  %784 = vmatprep.subr.mxu0 0.0
  %785 = vmatpush1.xpose.msra.mxu0 0.0
  %786 = vmatprep.subr.mxu0 0.0
  %787 = vmatpush1.xpose.msra.mxu0 0.0
  %788 = vmatprep.subr.mxu0 0.0
  %789 = vmatpush1.xpose.msra.mxu0 0.0
  %790 = vmatprep.subr.mxu0 0.0
  %791 = vmatpush1.xpose.msra.mxu0 0.0
  %792 = vmatprep.subr.mxu0 0.0
  %793 = vmatpush1.xpose.msra.mxu0 0.0
  %794 = vmatprep.subr.mxu0 0.0
  %795 = vmatpush1.xpose.msra.mxu0 0.0
  %796 = vmatprep.subr.mxu0 0.0
  %797 = vmatpush1.xpose.msra.mxu0 0.0
  %798 = vmatprep.subr.mxu0 0.0
  %799 = vmatpush1.xpose.msra.mxu0 0.0
  %800 = vmatprep.subr.mxu0 0.0
  %801 = vmatpush1.xpose.msra.mxu0 0.0
  %802 = vmatprep.subr.mxu0 0.0
  %803 = vmatpush1.xpose.msra.mxu0 0.0
  %804 = vmatprep.subr.mxu0 0.0
  %805 = vmatpush1.xpose.msra.mxu0 0.0
  %806 = vmatprep.mubr.f32.mxu0 0.0
  %807 = vmatmul.mubr.f32.gmra.mrb[0].mxu0 %v723
  %v808 = vpop.f32.mrb[0].mxu0
  %v809 = vadd.f32 0.0, %v808
  %v810 = vpop.f32.mrb[0].mxu0
  %811 = vmatprep.mubr.f32.mxu0 0.0
  %812 = vmatmul.mubr.f32.gmra.mrb[0].mxu0 %v726
  %v813 = vpop.f32.mrb[0].mxu0
  %v814 = vadd.f32 0.0, %v813
  %v815 = vpop.f32.mrb[0].mxu0
  %816 = vmatprep.mubr.f32.mxu0 0.0
  %817 = vmatmul.mubr.f32.gmra.mrb[0].mxu0 %v729
  %v818 = vpop.f32.mrb[0].mxu0
  %v819 = vadd.f32 0.0, %v818
  %v820 = vpop.f32.mrb[0].mxu0
  %821 = vmatprep.mubr.f32.mxu0 0.0
  %822 = vmatmul.mubr.f32.gmra.mrb[0].mxu0 %v732
  %v823 = vpop.f32.mrb[0].mxu0
  %v824 = vadd.f32 0.0, %v823
  %v825 = vpop.f32.mrb[0].mxu0
  %826 = vdwg.mxu0
  %v827 = vadd.f32 %v593, %v809
  %v828 = vadd.f32 %v598, %v814
  %v829 = vadd.f32 %v603, %v819
  %v830 = vadd.f32 %v608, %v824
  %v831 = vtanh.pop %v827
  %v832 = vtanh.pop %v828
  %v833 = vtanh.pop %v829
  %v834 = vtanh.pop %v830
  %839 = vrot.lane.b32.xlu0 %v717, 32
  %v840 = vpop.permute.xlu0 %839
  %841 = vrot.lane.b32.xlu0 %v718, 32
  %v842 = vpop.permute.xlu0 %841
  %843 = vrot.lane.b32.xlu0 %v719, 32
  %v844 = vpop.permute.xlu0 %843
  %845 = vrot.lane.b32.xlu0 %v720, 32
  %v846 = vpop.permute.xlu0 %845
  %v851 = vmul.f32 %v25, %v840
  %v852 = vmul.f32 %v26, %v842
  %v853 = vmul.f32 %v27, %v844
  %v854 = vmul.f32 %v28, %v846
  %vm855 = vcmask 392448
  %v856 = vsel %vm855, %v851, 0.0
  %v857 = vsel %vm855, %v852, 0.0
  %v858 = vadd.f32 %v856, %v857
  %v859 = vsel %vm855, %v853, 0.0
  %v860 = vadd.f32 %v858, %v859
  %v861 = vsel %vm855, %v854, 0.0
  %v862 = vadd.f32 %v860, %v861
  %v863 = vrot.slane %v862, 4
  %v864 = vadd.f32 %v862, %v863
  %v865 = vrot.slane %v864, 2
  %v866 = vadd.f32 %v864, %v865
  %v867 = vrot.slane %v866, 1
  %v868 = vadd.f32 %v866, %v867
  %873 = vrot.lane.b32.xlu0 %v831, 48
  %v874 = vpop.permute.xlu0 %873
  %875 = vrot.lane.b32.xlu0 %v832, 48
  %v876 = vpop.permute.xlu0 %875
  %877 = vrot.lane.b32.xlu0 %v833, 48
  %v878 = vpop.permute.xlu0 %877
  %879 = vrot.lane.b32.xlu0 %v834, 48
  %v880 = vpop.permute.xlu0 %879
  %v885 = vmul.f32 %v25, %v874
  %v886 = vmul.f32 %v26, %v876
  %v887 = vmul.f32 %v27, %v878
  %v888 = vmul.f32 %v28, %v880
  %vm889 = vcmask 556416
  %v890 = vsel %vm889, %v885, 0.0
  %v891 = vsel %vm889, %v886, 0.0
  %v892 = vadd.f32 %v890, %v891
  %v893 = vsel %vm889, %v887, 0.0
  %v894 = vadd.f32 %v892, %v893
  %v895 = vsel %vm889, %v888, 0.0
  %v896 = vadd.f32 %v894, %v895
  %v897 = vrot.slane %v896, 4
  %v898 = vadd.f32 %v896, %v897
  %v899 = vrot.slane %v898, 2
  %v900 = vadd.f32 %v898, %v899
  %v901 = vrot.slane %v900, 1
  %v902 = vadd.f32 %v900, %v901
  %v903 = vsel %vm855, %v868, -inf
  %904 = vmax.xlane.f32.xlu0 %v903
  %v905 = vpop.xlane.xlu0 %904
  %v906 = vsub.f32 %v868, %v905
  %v907 = vmul.f32 %v906, 1.442695
  %v908 = vpow.pop %v907
  %v909 = vmul.f32 %v31, %v908
  %911 = vrot.lane.b32.xlu0 %v909, 96
  %v912 = vpop.permute.xlu0 %911
  %vm914 = vcmask 123904
  %v915 = vsel %vm914, %v912, 0.0
  %916 = vadd.xlane.f32.xlu0 %v915
  %v917 = vpop.xlane.xlu0 %916
  %v918 = vrcp.pop %v917
  %v919 = vmul.f32 %v909, %v918
  %v920 = vsel %vm889, %v902, -inf
  %921 = vmax.xlane.f32.xlu0 %v920
  %v922 = vpop.xlane.xlu0 %921
  %v923 = vsub.f32 %v902, %v922
  %v924 = vmul.f32 %v923, 1.442695
  %v925 = vpow.pop %v924
  %v926 = vmul.f32 %v31, %v925
  %928 = vrot.lane.b32.xlu0 %v926, 80
  %v929 = vpop.permute.xlu0 %928
  %vm931 = vcmask 156672
  %v932 = vsel %vm931, %v929, 0.0
  %933 = vadd.xlane.f32.xlu0 %v932
  %v934 = vpop.xlane.xlu0 %933
  %v935 = vrcp.pop %v934
  %v936 = vmul.f32 %v926, %v935
  %938 = vrot.lane.b32.xlu0 %v919, 96
  %v939 = vpop.permute.xlu0 %938
  %v940 = vsel %vm721, %v939, 0
  %942 = vmatprep.subr.mxu0 0.0
  %943 = vmatpush1.msra.mxu0 %v143
  %944 = vmatprep.subr.mxu0 0.0
  %945 = vmatpush1.msra.mxu0 %v144
  %946 = vmatprep.subr.mxu0 0.0
  %947 = vmatpush1.msra.mxu0 0.0
  %948 = vmatprep.subr.mxu0 0.0
  %949 = vmatpush1.msra.mxu0 0.0
  %950 = vmatprep.subr.mxu0 0.0
  %951 = vmatpush1.msra.mxu0 0.0
  %952 = vmatprep.subr.mxu0 0.0
  %953 = vmatpush1.msra.mxu0 0.0
  %954 = vmatprep.subr.mxu0 0.0
  %955 = vmatpush1.msra.mxu0 0.0
  %956 = vmatprep.subr.mxu0 0.0
  %957 = vmatpush1.msra.mxu0 0.0
  %958 = vmatprep.subr.mxu0 0.0
  %959 = vmatpush1.msra.mxu0 0.0
  %960 = vmatprep.subr.mxu0 0.0
  %961 = vmatpush1.msra.mxu0 0.0
  %962 = vmatprep.subr.mxu0 0.0
  %963 = vmatpush1.msra.mxu0 0.0
  %964 = vmatprep.subr.mxu0 0.0
  %965 = vmatpush1.msra.mxu0 0.0
  %966 = vmatprep.subr.mxu0 0.0
  %967 = vmatpush1.msra.mxu0 0.0
  %968 = vmatprep.subr.mxu0 0.0
  %969 = vmatpush1.msra.mxu0 0.0
  %970 = vmatprep.subr.mxu0 0.0
  %971 = vmatpush1.msra.mxu0 0.0
  %972 = vmatprep.subr.mxu0 0.0
  %973 = vmatpush1.msra.mxu0 0.0
  %974 = vmatprep.subr.mxu0 0.0
  %975 = vmatpush1.msra.mxu0 0.0
  %976 = vmatprep.subr.mxu0 0.0
  %977 = vmatpush1.msra.mxu0 0.0
  %978 = vmatprep.subr.mxu0 0.0
  %979 = vmatpush1.msra.mxu0 0.0
  %980 = vmatprep.subr.mxu0 0.0
  %981 = vmatpush1.msra.mxu0 0.0
  %982 = vmatprep.subr.mxu0 0.0
  %983 = vmatpush1.msra.mxu0 0.0
  %984 = vmatprep.subr.mxu0 0.0
  %985 = vmatpush1.msra.mxu0 0.0
  %986 = vmatprep.subr.mxu0 0.0
  %987 = vmatpush1.msra.mxu0 0.0
  %988 = vmatprep.subr.mxu0 0.0
  %989 = vmatpush1.msra.mxu0 0.0
  %990 = vmatprep.subr.mxu0 0.0
  %991 = vmatpush1.msra.mxu0 0.0
  %992 = vmatprep.subr.mxu0 0.0
  %993 = vmatpush1.msra.mxu0 0.0
  %994 = vmatprep.subr.mxu0 0.0
  %995 = vmatpush1.msra.mxu0 0.0
  %996 = vmatprep.subr.mxu0 0.0
  %997 = vmatpush1.msra.mxu0 0.0
  %998 = vmatprep.subr.mxu0 0.0
  %999 = vmatpush1.msra.mxu0 0.0
  %1000 = vmatprep.subr.mxu0 0.0
  %1001 = vmatpush1.msra.mxu0 0.0
  %1002 = vmatprep.subr.mxu0 0.0
  %1003 = vmatpush1.msra.mxu0 0.0
  %1004 = vmatprep.subr.mxu0 0.0
  %1005 = vmatpush1.msra.mxu0 0.0
  %1006 = vmatprep.mubr.f32.mxu0 0.0
  %1007 = vmatmul.mubr.f32.gmra.mrb[0].mxu0 %v940
  %v1008 = vpop.f32.mrb[0].mxu0
  %v1009 = vadd.f32 0.0, %v1008
  %v1010 = vpop.f32.mrb[0].mxu0
  %1011 = vdwg.mxu0
  %1013 = vrot.lane.b32.xlu0 %v936, 80
  %v1014 = vpop.permute.xlu0 %1013
  %v1015 = vsel %vm611, %v1014, 0
  %v1017 = vsel %vm624, %v147, 0
  %1019 = vmatprep.subr.mxu0 0.0
  %1020 = vmatpush1.msra.mxu0 %v145
  %1021 = vmatprep.subr.mxu0 0.0
  %1022 = vmatpush1.msra.mxu0 %v146
  %1023 = vmatprep.subr.mxu0 0.0
  %1024 = vmatpush1.msra.mxu0 %v1017
  %1025 = vmatprep.subr.mxu0 0.0
  %1026 = vmatpush1.msra.mxu0 0.0
  %1027 = vmatprep.subr.mxu0 0.0
  %1028 = vmatpush1.msra.mxu0 0.0
  %1029 = vmatprep.subr.mxu0 0.0
  %1030 = vmatpush1.msra.mxu0 0.0
  %1031 = vmatprep.subr.mxu0 0.0
  %1032 = vmatpush1.msra.mxu0 0.0
  %1033 = vmatprep.subr.mxu0 0.0
  %1034 = vmatpush1.msra.mxu0 0.0
  %1035 = vmatprep.subr.mxu0 0.0
  %1036 = vmatpush1.msra.mxu0 0.0
  %1037 = vmatprep.subr.mxu0 0.0
  %1038 = vmatpush1.msra.mxu0 0.0
  %1039 = vmatprep.subr.mxu0 0.0
  %1040 = vmatpush1.msra.mxu0 0.0
  %1041 = vmatprep.subr.mxu0 0.0
  %1042 = vmatpush1.msra.mxu0 0.0
  %1043 = vmatprep.subr.mxu0 0.0
  %1044 = vmatpush1.msra.mxu0 0.0
  %1045 = vmatprep.subr.mxu0 0.0
  %1046 = vmatpush1.msra.mxu0 0.0
  %1047 = vmatprep.subr.mxu0 0.0
  %1048 = vmatpush1.msra.mxu0 0.0
  %1049 = vmatprep.subr.mxu0 0.0
  %1050 = vmatpush1.msra.mxu0 0.0
  %1051 = vmatprep.subr.mxu0 0.0
  %1052 = vmatpush1.msra.mxu0 0.0
  %1053 = vmatprep.subr.mxu0 0.0
  %1054 = vmatpush1.msra.mxu0 0.0
  %1055 = vmatprep.subr.mxu0 0.0
  %1056 = vmatpush1.msra.mxu0 0.0
  %1057 = vmatprep.subr.mxu0 0.0
  %1058 = vmatpush1.msra.mxu0 0.0
  %1059 = vmatprep.subr.mxu0 0.0
  %1060 = vmatpush1.msra.mxu0 0.0
  %1061 = vmatprep.subr.mxu0 0.0
  %1062 = vmatpush1.msra.mxu0 0.0
  %1063 = vmatprep.subr.mxu0 0.0
  %1064 = vmatpush1.msra.mxu0 0.0
  %1065 = vmatprep.subr.mxu0 0.0
  %1066 = vmatpush1.msra.mxu0 0.0
  %1067 = vmatprep.subr.mxu0 0.0
  %1068 = vmatpush1.msra.mxu0 0.0
  %1069 = vmatprep.subr.mxu0 0.0
  %1070 = vmatpush1.msra.mxu0 0.0
  %1071 = vmatprep.subr.mxu0 0.0
  %1072 = vmatpush1.msra.mxu0 0.0
  %1073 = vmatprep.subr.mxu0 0.0
  %1074 = vmatpush1.msra.mxu0 0.0
  %1075 = vmatprep.subr.mxu0 0.0
  %1076 = vmatpush1.msra.mxu0 0.0
  %1077 = vmatprep.subr.mxu0 0.0
  %1078 = vmatpush1.msra.mxu0 0.0
  %1079 = vmatprep.subr.mxu0 0.0
  %1080 = vmatpush1.msra.mxu0 0.0
  %1081 = vmatprep.subr.mxu0 0.0
  %1082 = vmatpush1.msra.mxu0 0.0
  %1083 = vmatprep.mubr.f32.mxu0 0.0
  %1084 = vmatmul.mubr.f32.gmra.mrb[0].mxu0 %v1015
  %v1085 = vpop.f32.mrb[0].mxu0
  %v1086 = vadd.f32 0.0, %v1085
  %v1087 = vpop.f32.mrb[0].mxu0
  %1088 = vdwg.mxu0
  %1091 = vrot.lane.b32.xlu0 %v25, 58
  %v1092 = vpop.permute.xlu0 %1091
  %1093 = vrot.lane.b32.xlu0 %v26, 58
  %v1094 = vpop.permute.xlu0 %1093
  %1095 = vrot.lane.b32.xlu0 %v27, 58
  %v1096 = vpop.permute.xlu0 %1095
  %1097 = vrot.lane.b32.xlu0 %v28, 58
  %v1098 = vpop.permute.xlu0 %1097
  %v1104 = vsel %vm196, %v1086, 0
  %1106 = vmatprep.subr.mxu0 0.0
  %1107 = vmatpush1.msra.mxu0 %v1092
  %1108 = vmatprep.subr.mxu0 0.0
  %1109 = vmatpush1.msra.mxu0 %v1094
  %1110 = vmatprep.subr.mxu0 0.0
  %1111 = vmatpush1.msra.mxu0 %v1096
  %1112 = vmatprep.subr.mxu0 0.0
  %1113 = vmatpush1.msra.mxu0 %v1098
  %1114 = vmatprep.subr.mxu0 0.0
  %1115 = vmatpush1.msra.mxu0 0.0
  %1116 = vmatprep.subr.mxu0 0.0
  %1117 = vmatpush1.msra.mxu0 0.0
  %1118 = vmatprep.subr.mxu0 0.0
  %1119 = vmatpush1.msra.mxu0 0.0
  %1120 = vmatprep.subr.mxu0 0.0
  %1121 = vmatpush1.msra.mxu0 0.0
  %1122 = vmatprep.subr.mxu0 0.0
  %1123 = vmatpush1.msra.mxu0 0.0
  %1124 = vmatprep.subr.mxu0 0.0
  %1125 = vmatpush1.msra.mxu0 0.0
  %1126 = vmatprep.subr.mxu0 0.0
  %1127 = vmatpush1.msra.mxu0 0.0
  %1128 = vmatprep.subr.mxu0 0.0
  %1129 = vmatpush1.msra.mxu0 0.0
  %1130 = vmatprep.subr.mxu0 0.0
  %1131 = vmatpush1.msra.mxu0 0.0
  %1132 = vmatprep.subr.mxu0 0.0
  %1133 = vmatpush1.msra.mxu0 0.0
  %1134 = vmatprep.subr.mxu0 0.0
  %1135 = vmatpush1.msra.mxu0 0.0
  %1136 = vmatprep.subr.mxu0 0.0
  %1137 = vmatpush1.msra.mxu0 0.0
  %1138 = vmatprep.subr.mxu0 0.0
  %1139 = vmatpush1.msra.mxu0 0.0
  %1140 = vmatprep.subr.mxu0 0.0
  %1141 = vmatpush1.msra.mxu0 0.0
  %1142 = vmatprep.subr.mxu0 0.0
  %1143 = vmatpush1.msra.mxu0 0.0
  %1144 = vmatprep.subr.mxu0 0.0
  %1145 = vmatpush1.msra.mxu0 0.0
  %1146 = vmatprep.subr.mxu0 0.0
  %1147 = vmatpush1.msra.mxu0 0.0
  %1148 = vmatprep.subr.mxu0 0.0
  %1149 = vmatpush1.msra.mxu0 0.0
  %1150 = vmatprep.subr.mxu0 0.0
  %1151 = vmatpush1.msra.mxu0 0.0
  %1152 = vmatprep.subr.mxu0 0.0
  %1153 = vmatpush1.msra.mxu0 0.0
  %1154 = vmatprep.subr.mxu0 0.0
  %1155 = vmatpush1.msra.mxu0 0.0
  %1156 = vmatprep.subr.mxu0 0.0
  %1157 = vmatpush1.msra.mxu0 0.0
  %1158 = vmatprep.subr.mxu0 0.0
  %1159 = vmatpush1.msra.mxu0 0.0
  %1160 = vmatprep.subr.mxu0 0.0
  %1161 = vmatpush1.msra.mxu0 0.0
  %1162 = vmatprep.subr.mxu0 0.0
  %1163 = vmatpush1.msra.mxu0 0.0
  %1164 = vmatprep.subr.mxu0 0.0
  %1165 = vmatpush1.msra.mxu0 0.0
  %1166 = vmatprep.subr.mxu0 0.0
  %1167 = vmatpush1.msra.mxu0 0.0
  %1168 = vmatprep.subr.mxu0 0.0
  %1169 = vmatpush1.msra.mxu0 0.0
  %1170 = vmatprep.mubr.f32.mxu0 0.0
  %1171 = vmatmul.mubr.f32.gmra.mrb[0].mxu0 %v1104
  %v1172 = vpop.f32.mrb[0].mxu0
  %v1173 = vadd.f32 0.0, %v1172
  %v1174 = vpop.f32.mrb[0].mxu0
  %1175 = vdwg.mxu0
  %1176 = vrot.lane.b32.xlu0 %v25, 60
  %v1177 = vpop.permute.xlu0 %1176
  %1178 = vrot.lane.b32.xlu0 %v26, 60
  %v1179 = vpop.permute.xlu0 %1178
  %1180 = vrot.lane.b32.xlu0 %v27, 60
  %v1181 = vpop.permute.xlu0 %1180
  %1182 = vrot.lane.b32.xlu0 %v28, 60
  %v1183 = vpop.permute.xlu0 %1182
  %v1189 = vsel %vm196, %v1009, 0
  %1191 = vmatprep.subr.mxu0 0.0
  %1192 = vmatpush1.msra.mxu0 %v1177
  %1193 = vmatprep.subr.mxu0 0.0
  %1194 = vmatpush1.msra.mxu0 %v1179
  %1195 = vmatprep.subr.mxu0 0.0
  %1196 = vmatpush1.msra.mxu0 %v1181
  %1197 = vmatprep.subr.mxu0 0.0
  %1198 = vmatpush1.msra.mxu0 %v1183
  %1199 = vmatprep.subr.mxu0 0.0
  %1200 = vmatpush1.msra.mxu0 0.0
  %1201 = vmatprep.subr.mxu0 0.0
  %1202 = vmatpush1.msra.mxu0 0.0
  %1203 = vmatprep.subr.mxu0 0.0
  %1204 = vmatpush1.msra.mxu0 0.0
  %1205 = vmatprep.subr.mxu0 0.0
  %1206 = vmatpush1.msra.mxu0 0.0
  %1207 = vmatprep.subr.mxu0 0.0
  %1208 = vmatpush1.msra.mxu0 0.0
  %1209 = vmatprep.subr.mxu0 0.0
  %1210 = vmatpush1.msra.mxu0 0.0
  %1211 = vmatprep.subr.mxu0 0.0
  %1212 = vmatpush1.msra.mxu0 0.0
  %1213 = vmatprep.subr.mxu0 0.0
  %1214 = vmatpush1.msra.mxu0 0.0
  %1215 = vmatprep.subr.mxu0 0.0
  %1216 = vmatpush1.msra.mxu0 0.0
  %1217 = vmatprep.subr.mxu0 0.0
  %1218 = vmatpush1.msra.mxu0 0.0
  %1219 = vmatprep.subr.mxu0 0.0
  %1220 = vmatpush1.msra.mxu0 0.0
  %1221 = vmatprep.subr.mxu0 0.0
  %1222 = vmatpush1.msra.mxu0 0.0
  %1223 = vmatprep.subr.mxu0 0.0
  %1224 = vmatpush1.msra.mxu0 0.0
  %1225 = vmatprep.subr.mxu0 0.0
  %1226 = vmatpush1.msra.mxu0 0.0
  %1227 = vmatprep.subr.mxu0 0.0
  %1228 = vmatpush1.msra.mxu0 0.0
  %1229 = vmatprep.subr.mxu0 0.0
  %1230 = vmatpush1.msra.mxu0 0.0
  %1231 = vmatprep.subr.mxu0 0.0
  %1232 = vmatpush1.msra.mxu0 0.0
  %1233 = vmatprep.subr.mxu0 0.0
  %1234 = vmatpush1.msra.mxu0 0.0
  %1235 = vmatprep.subr.mxu0 0.0
  %1236 = vmatpush1.msra.mxu0 0.0
  %1237 = vmatprep.subr.mxu0 0.0
  %1238 = vmatpush1.msra.mxu0 0.0
  %1239 = vmatprep.subr.mxu0 0.0
  %1240 = vmatpush1.msra.mxu0 0.0
  %1241 = vmatprep.subr.mxu0 0.0
  %1242 = vmatpush1.msra.mxu0 0.0
  %1243 = vmatprep.subr.mxu0 0.0
  %1244 = vmatpush1.msra.mxu0 0.0
  %1245 = vmatprep.subr.mxu0 0.0
  %1246 = vmatpush1.msra.mxu0 0.0
  %1247 = vmatprep.subr.mxu0 0.0
  %1248 = vmatpush1.msra.mxu0 0.0
  %1249 = vmatprep.subr.mxu0 0.0
  %1250 = vmatpush1.msra.mxu0 0.0
  %1251 = vmatprep.subr.mxu0 0.0
  %1252 = vmatpush1.msra.mxu0 0.0
  %1253 = vmatprep.subr.mxu0 0.0
  %1254 = vmatpush1.msra.mxu0 0.0
  %1255 = vmatprep.mubr.f32.mxu0 0.0
  %1256 = vmatmul.mubr.f32.gmra.mrb[0].mxu0 %v1189
  %v1257 = vpop.f32.mrb[0].mxu0
  %v1258 = vadd.f32 %v1173, %v1257
  %v1259 = vpop.f32.mrb[0].mxu0
  %1260 = vdwg.mxu0
  %v1261 = vlaneseq
  %v1262 = vshrl.u32 %v1261, 7
  %v1263 = vsub.s32 0, %v1262
  %v1264 = vrot.slane %v30, %v1263
  %1266 = vrot.lane.b32.xlu0 %v1264, 40
  %v1267 = vpop.permute.xlu0 %1266
  %v1269 = vadd.f32 %v1258, %v1267
  %1270 = vrot.lane.b32.xlu0 %v919, 120
  %v1271 = vpop.permute.xlu0 %1270
  %v1273 = vadd.f32 %v919, %v1271
  %1274 = vrot.lane.b32.xlu0 %v936, 118
  %v1275 = vpop.permute.xlu0 %1274
  %v1277 = vadd.f32 %v936, %v1275
  %1279 = vrot.lane.b32.xlu0 %v1273, 98
  %v1280 = vpop.permute.xlu0 %1279
  %1283 = vrot.lane.b32.xlu0 %v1277, 90
  %v1284 = vpop.permute.xlu0 %1283
  %vm1286 = vcmask 15360
  %v1287 = vsel %vm1286, %v1269, %v1280
  %vm1288 = vcmask 80896
  %v1289 = vsel %vm1288, %v1287, %v1284
  %v1290 = vsel %vm611, %v1289, 0.0
  %1291 = vst [vmem:[%s2] sm:$0x3] %v1290
  // Predicated region
  $region10: #{hyphen_forward.1} parent=0 // pred_check
    _
  $region11: #{hyphen_forward.1} parent=0 // pred_check_branch
    %1293 = sbr.rel (0) target = $region13
  $region12: #{hyphen_forward.1} parent=0 // pred_region
    _
  $region13: #{hyphen_forward.1} parent=0 // pred_fallthru
    _
  // Predicated region
  $region14: #{hyphen_forward.1} parent=0 // pred_check
    _
  $region15: #{hyphen_forward.1} parent=0 // pred_check_branch
    %1295 = sbr.rel (0) target = $region17
  $region16: #{hyphen_forward.1} parent=0 // pred_region
    _
  $region17: #{hyphen_forward.1} parent=0 // pred_fallthru
    _

</llo_original>
